<compile_context>
chip_gen: v5e
topology: v5e:2x2
jax: 0.10.0
libtpu: 0.0.40
codegen_flags: <defaults>
</compile_context>

<pallas_src>
import functools
import numpy as np
import jax
import jax.numpy as jnp
from jax import lax
from jax.experimental import pallas as pl
from jax.experimental.pallas import tpu as pltpu


# ------------------------------ fused kernel --------------------------------

def _layernorm(x, g, b, eps):
    mean = jnp.mean(x, axis=-1, keepdims=True)
    xc = x - mean
    var = jnp.mean(xc * xc, axis=-1, keepdims=True)   # biased variance (torch LayerNorm)
    return xc * lax.rsqrt(var + eps) * g + b


def _encoder_layer_kernel(
    src_ref, srcc_ref, pos_ref, fk_ref, bias_ref, hmask_ref,
    wq_ref, bq_ref, wk_ref, bk_ref, wv_ref, bv_ref, wo_ref, bo_ref,
    wfk_ref, wfq_ref, pjb_ref, p2a_ref, p2b_ref, p2bias_ref,
    l1w_ref, l1b_ref, l2w_ref, l2b_ref,
    n1g_ref, n1b_ref, n2g_ref, n2b_ref,
    out_ref,
    *, M, E, H, Q, eps, mm_dtype):
    # Single grid step: all M = B*S rows processed at once (row-parallel ops are fused);
    # per-batch attention is handled with an additive block-diagonal bias.

    def mm(a, b):
        # a @ b with f32 accumulation; set mm_dtype=bfloat16 for the v6e/v7x MXU fast path.
        if mm_dtype != jnp.float32:
            a = a.astype(mm_dtype)
            b = b.astype(mm_dtype)
        return jnp.dot(a, b, preferred_element_type=jnp.float32)

    def mm_nt(a, b):
        # a (M,K) @ b(N,K)^T without materializing a transpose.
        if mm_dtype != jnp.float32:
            a = a.astype(mm_dtype)
            b = b.astype(mm_dtype)
        return lax.dot_general(a, b, (((1,), (1,)), ((), ())),
                               preferred_element_type=jnp.float32)

    src = src_ref[...]            # (M, E)
    srcc = srcc_ref[...]          # (M, E)
    pos = pos_ref[...]            # (M, E)

    # ----- fused Q/K/V projections (weights pre-transposed, scale folded into Wq/bq) -----
    xq = src + pos
    xk = srcc + pos
    q = mm(xq, wq_ref[...]) + bq_ref[...]     # (M, E)
    k = mm(xk, wk_ref[...]) + bk_ref[...]     # (M, E)
    v = mm(srcc, wv_ref[...]) + bv_ref[...]   # (M, E)

    # ----- multi-head attention via per-head lane masks (no 8-wide slices, no concat) ----
    bias = bias_ref[...]                      # (M, M): 0 within batch, -1e30 across batches
    z = jnp.zeros((M, E), jnp.float32)        # concat-of-heads result, built by accumulation
    for h in range(H):
        hm = hmask_ref[h]                     # (1, E) 0/1 mask selecting head h lanes
        s = mm_nt(q * hm, k) + bias           # (M, M); zeroed q-lanes ==> exact q_h . k_h
        s = s - jnp.max(s, axis=-1, keepdims=True)
        e = jnp.exp(s)
        p = e * pl.reciprocal(jnp.sum(e, axis=-1, keepdims=True), approx=True)
        z = z + mm(p, v * hm)                 # fills only head-h lanes of z
    src2 = mm(z, wo_ref[...]) + bo_ref[...]   # single lane-dense out-projection (M, E)

    # ----- graph-feature branch -----------------------------------------------------------
    # projection(concat([fk - fq, fq])) split algebraically:
    #   y = fk @ W_fk^T + fq @ (W_fq - W_fk)^T + b   (splits hoisted to the wrapper).
    common = mm(src, wfq_ref[...]) + pjb_ref[...]            # (M, E), neighbour-invariant
    yk = mm(fk_ref[...], wfk_ref[...])                       # one (Q*M, E) matmul (>=128 rows)
    src3 = None
    for qq in range(Q):                                      # LeakyReLU(0.2) + running max
        t = yk[qq * M:(qq + 1) * M] + common
        t = jnp.where(t >= 0.0, t, 0.2 * t)                  # module uses LeakyReLU(0.2)
        src3 = t if src3 is None else jnp.maximum(src3, t)   # (M, E)

    # ----- projection2 on [src2 | src3] (pre-split matmuls), residual + norm1 -------------
    comb = mm(src2, p2a_ref[...]) + mm(src3, p2b_ref[...]) + p2bias_ref[...]
    x1 = _layernorm(src + comb, n1g_ref[...], n1b_ref[...], eps)

    # ----- feed-forward (ReLU), residual + norm2 -------------------------------------------
    h1 = jnp.maximum(mm(x1, l1w_ref[...]) + l1b_ref[...], 0.0)    # (M, F)
    h2 = mm(h1, l2w_ref[...]) + l2b_ref[...]                      # (M, E)
    out = _layernorm(x1 + h2, n2g_ref[...], n2b_ref[...], eps)
    # TODO(synk): E=32 (<128 lanes) leaves masked vst's; pad E to a 128-multiple for
    # production configs (lane-dense output stores, biggest win on v5e).
    out_ref[...] = out.astype(out_ref.dtype)


# ----------------------- static neighbor-index machinery ---------------------------

def get_index_np(b, n, num_query, w, h):
    # Faithful port of get_index(): clamped 3x3 neighborhood indices, cast to uint8
    # exactly as the PyTorch code does (values wrap mod 256 for large b*n).
    kernel = 3 if num_query == 9 else num_query
    padding = kernel // 2
    idx = np.zeros(b * n * num_query, dtype=np.int64)
    for tb in range(b):
        for i in range(h):
            for j in range(w):
                temp = tb * n + i * w + j
                for ii in range(kernel):
                    for jj in range(kernel):
                        ttemp = num_query * temp + ii * kernel + jj
                        bi = i - padding + ii
                        biasi = bi if bi >= 0 else 0
                        bj = j - padding + jj
                        biasj = bj if bj >= 0 else 0
                        biasi = biasi if bi < h else h - 1
                        biasj = biasj if bj < w else w - 1
                        tidx = tb * n + biasi * w + biasj
                        idx[ttemp] = tidx
    return idx.astype(np.uint8)


def build_gather_rows(B, S, w, h, num_query=9):
    # Row indices (into batch-major (B*S, E) keys) for the 9-neighbour gather, laid out
    # q-major so that rows[q*M + b*S + n] feeds output row (b, n) for neighbour slot q.
    # TODO(synk): faithful to the PyTorch code incl. its uint8 cast (wraps for B*S > 256)
    # and the (B,S,9)->(B,9,S) re-view + //9 indexing of the expanded key tensor.
    idx_u8 = get_index_np(B, S, num_query, w, h)
    gsrc = idx_u8.reshape(B, num_query, S).astype(np.int64) // 9
    rows = np.transpose(gsrc, (1, 0, 2)).reshape(num_query * B * S)
    return jnp.asarray(rows.astype(np.int32))


def build_attn_bias(B, S):
    # Additive block-diagonal bias: 0 within a batch, -1e30 across batches.
    M = B * S
    same = np.equal.outer(np.arange(M) // S, np.arange(M) // S)
    return jnp.asarray(np.where(same, 0.0, -1e30).astype(np.float32))


def build_head_masks(nhead, d_model):
    Dh = d_model // nhead
    m = np.zeros((nhead, 1, d_model), np.float32)
    for h in range(nhead):
        m[h, 0, h * Dh:(h + 1) * Dh] = 1.0
    return jnp.asarray(m)


# --------------------------------- parameters --------------------------------------

def init_params(key, d_model, nhead, dim_ff):
    ks = jax.random.split(key, 12)

    def wgt(k, shape, scale=0.05):
        return (scale * jax.random.normal(k, shape)).astype(jnp.float32)

    return dict(
        in_proj_w=wgt(ks[0], (3 * d_model, d_model)),     # torch layout (out, in)
        in_proj_b=wgt(ks[1], (1, 3 * d_model)),
        out_proj_w=wgt(ks[2], (d_model, d_model)),
        out_proj_b=wgt(ks[3], (1, d_model)),
        proj_w=wgt(ks[4], (d_model, 2 * d_model)),        # projection: Linear(2d, d)
        proj_b=wgt(ks[5], (1, d_model)),
        proj2_w=wgt(ks[6], (d_model, 2 * d_model)),       # projection2: Linear(2d, d)
        proj2_b=wgt(ks[7], (1, d_model)),
        lin1_w=wgt(ks[8], (dim_ff, d_model)),
        lin1_b=wgt(ks[9], (1, dim_ff)),
        lin2_w=wgt(ks[10], (d_model, dim_ff)),
        lin2_b=wgt(ks[11], (1, d_model)),
        norm1_g=jnp.ones((1, d_model), jnp.float32),
        norm1_b=jnp.zeros((1, d_model), jnp.float32),
        norm2_g=jnp.ones((1, d_model), jnp.float32),
        norm2_b=jnp.zeros((1, d_model), jnp.float32),
    )


def prepare_params(params, *, d_model, nhead):
    # Hoist ALL weight slicing / algebra out of the kernel (done once at prep time):
    # pre-transpose to (in, out), fold the 1/sqrt(Dh) scale into Wq/bq, split the
    # projection / projection2 2E-wide weights into E-wide halves.
    E = d_model
    Dh = E // nhead
    scale = float(Dh) ** -0.5
    ipw = params["in_proj_w"]                    # (3E, E), torch (out, in)
    ipb = params["in_proj_b"].reshape(3 * E)
    pjw = params["proj_w"]                       # (E, 2E)
    p2w = params["proj2_w"]                      # (E, 2E)
    return dict(
        wq=(ipw[0:E] * scale).T, bq=(ipb[0:E] * scale).reshape(1, E),
        wk=ipw[E:2 * E].T,       bk=ipb[E:2 * E].reshape(1, E),
        wv=ipw[2 * E:3 * E].T,   bv=ipb[2 * E:3 * E].reshape(1, E),
        wo=params["out_proj_w"].T, bo=params["out_proj_b"],
        w_fk=pjw[:, 0:E].T,
        w_fq=(pjw[:, E:2 * E] - pjw[:, 0:E]).T,
        pj_b=params["proj_b"],
        p2_a=p2w[:, 0:E].T, p2_b=p2w[:, E:2 * E].T,
        p2_bias=params["proj2_b"],
        l1w=params["lin1_w"].T, l1b=params["lin1_b"],
        l2w=params["lin2_w"].T, l2b=params["lin2_b"],
        n1g=params["norm1_g"], n1b=params["norm1_b"],
        n2g=params["norm2_g"], n2b=params["norm2_b"],
    )


# --------------------------------- wrapper -----------------------------------------

def encoder_layer_forward(src, srcc, pos, prepped, gather_rows, attn_bias, head_masks,
                          *, nhead, mm_dtype=jnp.float32):
    S, B, E = src.shape
    M = B * S
    Q = 9

    # (S, B, E) -> batch-major (B*S, E).
    def to2d(x):
        return jnp.transpose(x, (1, 0, 2)).reshape(M, E)

    src2d, srcc2d, pos2d = to2d(src), to2d(srcc), to2d(pos)

    # 9-neighbour gather with static indices, done once here (plain XLA gather on (M,E)
    # data) -- replaces the O(9*B^2*S^2) one-hot matrix + in-kernel one-hot matmul.
    fk2d = jnp.take(srcc2d, gather_rows, axis=0)          # (Q*M, E)

    def full_spec(a):
        nd = a.ndim
        return pl.BlockSpec(a.shape, lambda i, _nd=nd: (0,) * _nd)

    inputs = (src2d, srcc2d, pos2d, fk2d, attn_bias, head_masks,
              prepped["wq"], prepped["bq"], prepped["wk"], prepped["bk"],
              prepped["wv"], prepped["bv"], prepped["wo"], prepped["bo"],
              prepped["w_fk"], prepped["w_fq"], prepped["pj_b"],
              prepped["p2_a"], prepped["p2_b"], prepped["p2_bias"],
              prepped["l1w"], prepped["l1b"], prepped["l2w"], prepped["l2b"],
              prepped["n1g"], prepped["n1b"], prepped["n2g"], prepped["n2b"])

    kernel = functools.partial(_encoder_layer_kernel, M=M, E=E, H=nhead, Q=Q,
                               eps=1e-5, mm_dtype=mm_dtype)

    # TODO(synk): at production sizes (S=h*w ~ 1K+, larger B/E) retile this into a
    # row-tiled parallel grid (v7x 2 TCs), flash-style KV blocking for the (M,M) scores,
    # and set vmem_limit_bytes; at the toy shape a single fused step is fastest.
    out2d = pl.pallas_call(
        kernel,
        out_shape=jax.ShapeDtypeStruct((M, E), jnp.float32),
        grid=(1,),
        in_specs=[full_spec(a) for a in inputs],
        out_specs=pl.BlockSpec((M, E), lambda i: (0, 0)),
        compiler_params=pltpu.CompilerParams(dimension_semantics=("arbitrary",)),
    )(*inputs)

    return jnp.transpose(out2d.reshape(B, S, E), (1, 0, 2))   # back to (S, B, E)


# ----------------------------------- main -------------------------------------------

if __name__ == "__main__":
    d_model, nhead, dim_ff = 32, 4, 64
    B, w_sp, h_sp = 2, 4, 4
    S = w_sp * h_sp

    key = jax.random.PRNGKey(0)
    k_src, k_srcc, k_pos, k_par = jax.random.split(key, 4)
    src = jax.random.normal(k_src, (S, B, d_model), jnp.float32)
    srcc = jax.random.normal(k_srcc, (S, B, d_model), jnp.float32)
    pos = jax.random.normal(k_pos, (S, B, d_model), jnp.float32)

    params = init_params(k_par, d_model, nhead, dim_ff)
    prepped = prepare_params(params, d_model=d_model, nhead=nhead)

    gather_rows = build_gather_rows(B, S, w_sp, h_sp)     # static neighbour row indices
    attn_bias = build_attn_bias(B, S)                     # block-diagonal additive mask
    head_masks = build_head_masks(nhead, d_model)         # per-head 0/1 lane masks

    fwd = jax.jit(functools.partial(encoder_layer_forward, nhead=nhead))
    out = fwd(src, srcc, pos, prepped, gather_rows, attn_bias, head_masks)
    jax.block_until_ready(out)
    assert out.shape == (S, B, d_model) and out.dtype == jnp.float32
    print("KERNEL_OK")
</pallas_src>

<mosaic_0001>
module attributes {stable_mosaic.version = 11 : i64} {
  func.func @_encoder_layer_kernel(%arg0: i32, %arg1: memref<32x32xf32, #tpu.memory_space<vmem>>, %arg2: memref<32x32xf32, #tpu.memory_space<vmem>>, %arg3: memref<32x32xf32, #tpu.memory_space<vmem>>, %arg4: memref<288x32xf32, #tpu.memory_space<vmem>>, %arg5: memref<32x32xf32, #tpu.memory_space<vmem>>, %arg6: memref<4x1x32xf32, #tpu.memory_space<vmem>>, %arg7: memref<32x32xf32, #tpu.memory_space<vmem>>, %arg8: memref<1x32xf32, #tpu.memory_space<vmem>>, %arg9: memref<32x32xf32, #tpu.memory_space<vmem>>, %arg10: memref<1x32xf32, #tpu.memory_space<vmem>>, %arg11: memref<32x32xf32, #tpu.memory_space<vmem>>, %arg12: memref<1x32xf32, #tpu.memory_space<vmem>>, %arg13: memref<32x32xf32, #tpu.memory_space<vmem>>, %arg14: memref<1x32xf32, #tpu.memory_space<vmem>>, %arg15: memref<32x32xf32, #tpu.memory_space<vmem>>, %arg16: memref<32x32xf32, #tpu.memory_space<vmem>>, %arg17: memref<1x32xf32, #tpu.memory_space<vmem>>, %arg18: memref<32x32xf32, #tpu.memory_space<vmem>>, %arg19: memref<32x32xf32, #tpu.memory_space<vmem>>, %arg20: memref<1x32xf32, #tpu.memory_space<vmem>>, %arg21: memref<32x64xf32, #tpu.memory_space<vmem>>, %arg22: memref<1x64xf32, #tpu.memory_space<vmem>>, %arg23: memref<64x32xf32, #tpu.memory_space<vmem>>, %arg24: memref<1x32xf32, #tpu.memory_space<vmem>>, %arg25: memref<1x32xf32, #tpu.memory_space<vmem>>, %arg26: memref<1x32xf32, #tpu.memory_space<vmem>>, %arg27: memref<1x32xf32, #tpu.memory_space<vmem>>, %arg28: memref<1x32xf32, #tpu.memory_space<vmem>>, %arg29: memref<32x32xf32, #tpu.memory_space<vmem>>) attributes {dimension_semantics = [#tpu.dimension_semantics<arbitrary>], iteration_bounds = array<i64: 1>, scalar_prefetch = 0 : i64, scratch_operands = 0 : i64, tpu.core_type = #tpu.core_type<tc>, window_params = [{pipeline_mode = #tpu.pipeline_mode<synchronous>, transform_indices = @transform_0, window_bounds = array<i64: 32, 32>}, {pipeline_mode = #tpu.pipeline_mode<synchronous>, transform_indices = @transform_1, window_bounds = array<i64: 32, 32>}, {pipeline_mode = #tpu.pipeline_mode<synchronous>, transform_indices = @transform_2, window_bounds = array<i64: 32, 32>}, {pipeline_mode = #tpu.pipeline_mode<synchronous>, transform_indices = @transform_3, window_bounds = array<i64: 288, 32>}, {pipeline_mode = #tpu.pipeline_mode<synchronous>, transform_indices = @transform_4, window_bounds = array<i64: 32, 32>}, {pipeline_mode = #tpu.pipeline_mode<synchronous>, transform_indices = @transform_5, window_bounds = array<i64: 4, 1, 32>}, {pipeline_mode = #tpu.pipeline_mode<synchronous>, transform_indices = @transform_6, window_bounds = array<i64: 32, 32>}, {pipeline_mode = #tpu.pipeline_mode<synchronous>, transform_indices = @transform_7, window_bounds = array<i64: 1, 32>}, {pipeline_mode = #tpu.pipeline_mode<synchronous>, transform_indices = @transform_8, window_bounds = array<i64: 32, 32>}, {pipeline_mode = #tpu.pipeline_mode<synchronous>, transform_indices = @transform_9, window_bounds = array<i64: 1, 32>}, {pipeline_mode = #tpu.pipeline_mode<synchronous>, transform_indices = @transform_10, window_bounds = array<i64: 32, 32>}, {pipeline_mode = #tpu.pipeline_mode<synchronous>, transform_indices = @transform_11, window_bounds = array<i64: 1, 32>}, {pipeline_mode = #tpu.pipeline_mode<synchronous>, transform_indices = @transform_12, window_bounds = array<i64: 32, 32>}, {pipeline_mode = #tpu.pipeline_mode<synchronous>, transform_indices = @transform_13, window_bounds = array<i64: 1, 32>}, {pipeline_mode = #tpu.pipeline_mode<synchronous>, transform_indices = @transform_14, window_bounds = array<i64: 32, 32>}, {pipeline_mode = #tpu.pipeline_mode<synchronous>, transform_indices = @transform_15, window_bounds = array<i64: 32, 32>}, {pipeline_mode = #tpu.pipeline_mode<synchronous>, transform_indices = @transform_16, window_bounds = array<i64: 1, 32>}, {pipeline_mode = #tpu.pipeline_mode<synchronous>, transform_indices = @transform_17, window_bounds = array<i64: 32, 32>}, {pipeline_mode = #tpu.pipeline_mode<synchronous>, transform_indices = @transform_18, window_bounds = array<i64: 32, 32>}, {pipeline_mode = #tpu.pipeline_mode<synchronous>, transform_indices = @transform_19, window_bounds = array<i64: 1, 32>}, {pipeline_mode = #tpu.pipeline_mode<synchronous>, transform_indices = @transform_20, window_bounds = array<i64: 32, 64>}, {pipeline_mode = #tpu.pipeline_mode<synchronous>, transform_indices = @transform_21, window_bounds = array<i64: 1, 64>}, {pipeline_mode = #tpu.pipeline_mode<synchronous>, transform_indices = @transform_22, window_bounds = array<i64: 64, 32>}, {pipeline_mode = #tpu.pipeline_mode<synchronous>, transform_indices = @transform_23, window_bounds = array<i64: 1, 32>}, {pipeline_mode = #tpu.pipeline_mode<synchronous>, transform_indices = @transform_24, window_bounds = array<i64: 1, 32>}, {pipeline_mode = #tpu.pipeline_mode<synchronous>, transform_indices = @transform_25, window_bounds = array<i64: 1, 32>}, {pipeline_mode = #tpu.pipeline_mode<synchronous>, transform_indices = @transform_26, window_bounds = array<i64: 1, 32>}, {pipeline_mode = #tpu.pipeline_mode<synchronous>, transform_indices = @transform_27, window_bounds = array<i64: 1, 32>}, {pipeline_mode = #tpu.pipeline_mode<synchronous>, transform_indices = @transform_28, window_bounds = array<i64: 32, 32>}]} {
    %c0 = arith.constant 0 : index
    %c0_0 = arith.constant 0 : index
    %0 = vector.load %arg1[%c0, %c0_0] : memref<32x32xf32, #tpu.memory_space<vmem>>, vector<32x32xf32>
    %c0_1 = arith.constant 0 : index
    %c0_2 = arith.constant 0 : index
    %1 = vector.load %arg2[%c0_1, %c0_2] : memref<32x32xf32, #tpu.memory_space<vmem>>, vector<32x32xf32>
    %c0_3 = arith.constant 0 : index
    %c0_4 = arith.constant 0 : index
    %2 = vector.load %arg3[%c0_3, %c0_4] : memref<32x32xf32, #tpu.memory_space<vmem>>, vector<32x32xf32>
    %3 = arith.addf %0, %2 : vector<32x32xf32>
    %4 = arith.addf %1, %2 : vector<32x32xf32>
    %c0_5 = arith.constant 0 : index
    %c0_6 = arith.constant 0 : index
    %5 = vector.load %arg7[%c0_5, %c0_6] : memref<32x32xf32, #tpu.memory_space<vmem>>, vector<32x32xf32>
    %cst = arith.constant dense<0.000000e+00> : vector<32x32xf32>
    %6 = tpu.matmul %3, %5, %cst {dimension_numbers = #tpu.dot_dimension_numbers<[1], [0], [0], [1], [0, 0, 1, 1], [], []>} : vector<32x32xf32>, vector<32x32xf32>, vector<32x32xf32> -> vector<32x32xf32>
    %c0_7 = arith.constant 0 : index
    %c0_8 = arith.constant 0 : index
    %7 = vector.load %arg8[%c0_7, %c0_8] : memref<1x32xf32, #tpu.memory_space<vmem>>, vector<1x32xf32>
    %8 = vector.broadcast %7 : vector<1x32xf32> to vector<32x32xf32>
    %9 = arith.addf %6, %8 : vector<32x32xf32>
    %c0_9 = arith.constant 0 : index
    %c0_10 = arith.constant 0 : index
    %10 = vector.load %arg9[%c0_9, %c0_10] : memref<32x32xf32, #tpu.memory_space<vmem>>, vector<32x32xf32>
    %cst_11 = arith.constant dense<0.000000e+00> : vector<32x32xf32>
    %11 = tpu.matmul %4, %10, %cst_11 {dimension_numbers = #tpu.dot_dimension_numbers<[1], [0], [0], [1], [0, 0, 1, 1], [], []>} : vector<32x32xf32>, vector<32x32xf32>, vector<32x32xf32> -> vector<32x32xf32>
    %c0_12 = arith.constant 0 : index
    %c0_13 = arith.constant 0 : index
    %12 = vector.load %arg10[%c0_12, %c0_13] : memref<1x32xf32, #tpu.memory_space<vmem>>, vector<1x32xf32>
    %13 = vector.broadcast %12 : vector<1x32xf32> to vector<32x32xf32>
    %14 = arith.addf %11, %13 : vector<32x32xf32>
    %c0_14 = arith.constant 0 : index
    %c0_15 = arith.constant 0 : index
    %15 = vector.load %arg11[%c0_14, %c0_15] : memref<32x32xf32, #tpu.memory_space<vmem>>, vector<32x32xf32>
    %cst_16 = arith.constant dense<0.000000e+00> : vector<32x32xf32>
    %16 = tpu.matmul %1, %15, %cst_16 {dimension_numbers = #tpu.dot_dimension_numbers<[1], [0], [0], [1], [0, 0, 1, 1], [], []>} : vector<32x32xf32>, vector<32x32xf32>, vector<32x32xf32> -> vector<32x32xf32>
    %c0_17 = arith.constant 0 : index
    %c0_18 = arith.constant 0 : index
    %17 = vector.load %arg12[%c0_17, %c0_18] : memref<1x32xf32, #tpu.memory_space<vmem>>, vector<1x32xf32>
    %18 = vector.broadcast %17 : vector<1x32xf32> to vector<32x32xf32>
    %19 = arith.addf %16, %18 : vector<32x32xf32>
    %c0_19 = arith.constant 0 : index
    %c0_20 = arith.constant 0 : index
    %20 = vector.load %arg5[%c0_19, %c0_20] : memref<32x32xf32, #tpu.memory_space<vmem>>, vector<32x32xf32>
    %cst_21 = arith.constant 0.000000e+00 : f32
    %21 = vector.broadcast %cst_21 : f32 to vector<32x32xf32>
    %c0_22 = arith.constant 0 : index
    %c0_23 = arith.constant 0 : index
    %c0_24 = arith.constant 0 : index
    %22 = vector.load %arg6[%c0_22, %c0_23, %c0_24] : memref<4x1x32xf32, #tpu.memory_space<vmem>>, vector<1x1x32xf32>
    %23 = vector.shape_cast %22 : vector<1x1x32xf32> to vector<1x32xf32>
    %24 = vector.broadcast %23 : vector<1x32xf32> to vector<32x32xf32>
    %25 = arith.mulf %9, %24 : vector<32x32xf32>
    %cst_25 = arith.constant dense<0.000000e+00> : vector<32x32xf32>
    %26 = tpu.matmul %25, %14, %cst_25 {dimension_numbers = #tpu.dot_dimension_numbers<[1], [1], [0], [0], [0, 0, 1, 0], [], []>} : vector<32x32xf32>, vector<32x32xf32>, vector<32x32xf32> -> vector<32x32xf32>
    %27 = arith.addf %26, %20 : vector<32x32xf32>
    %cst_26 = arith.constant dense<0xFF800000> : vector<32xf32>
    %28 = vector.multi_reduction <maximumf>, %27, %cst_26 [1] : vector<32x32xf32> to vector<32xf32>
    %29 = vector.shape_cast %28 : vector<32xf32> to vector<32x1xf32>
    %30 = vector.broadcast %29 : vector<32x1xf32> to vector<32x32xf32>
    %31 = arith.subf %27, %30 : vector<32x32xf32>
    %32 = math.exp %31 : vector<32x32xf32>
    %cst_27 = arith.constant dense<0.000000e+00> : vector<32xf32>
    %33 = vector.multi_reduction <add>, %32, %cst_27 [1] : vector<32x32xf32> to vector<32xf32>
    %34 = vector.shape_cast %33 : vector<32xf32> to vector<32x1xf32>
    %35 = tpu.reciprocal %34 {approx = true} : vector<32x1xf32> -> vector<32x1xf32>
    %36 = vector.broadcast %35 : vector<32x1xf32> to vector<32x32xf32>
    %37 = arith.mulf %32, %36 : vector<32x32xf32>
    %38 = vector.broadcast %23 : vector<1x32xf32> to vector<32x32xf32>
    %39 = arith.mulf %19, %38 : vector<32x32xf32>
    %cst_28 = arith.constant dense<0.000000e+00> : vector<32x32xf32>
    %40 = tpu.matmul %37, %39, %cst_28 {dimension_numbers = #tpu.dot_dimension_numbers<[1], [0], [0], [1], [0, 0, 1, 1], [], []>} : vector<32x32xf32>, vector<32x32xf32>, vector<32x32xf32> -> vector<32x32xf32>
    %41 = arith.addf %21, %40 : vector<32x32xf32>
    %c1 = arith.constant 1 : index
    %c0_29 = arith.constant 0 : index
    %c0_30 = arith.constant 0 : index
    %42 = vector.load %arg6[%c1, %c0_29, %c0_30] : memref<4x1x32xf32, #tpu.memory_space<vmem>>, vector<1x1x32xf32>
    %43 = vector.shape_cast %42 : vector<1x1x32xf32> to vector<1x32xf32>
    %44 = vector.broadcast %43 : vector<1x32xf32> to vector<32x32xf32>
    %45 = arith.mulf %9, %44 : vector<32x32xf32>
    %cst_31 = arith.constant dense<0.000000e+00> : vector<32x32xf32>
    %46 = tpu.matmul %45, %14, %cst_31 {dimension_numbers = #tpu.dot_dimension_numbers<[1], [1], [0], [0], [0, 0, 1, 0], [], []>} : vector<32x32xf32>, vector<32x32xf32>, vector<32x32xf32> -> vector<32x32xf32>
    %47 = arith.addf %46, %20 : vector<32x32xf32>
    %cst_32 = arith.constant dense<0xFF800000> : vector<32xf32>
    %48 = vector.multi_reduction <maximumf>, %47, %cst_32 [1] : vector<32x32xf32> to vector<32xf32>
    %49 = vector.shape_cast %48 : vector<32xf32> to vector<32x1xf32>
    %50 = vector.broadcast %49 : vector<32x1xf32> to vector<32x32xf32>
    %51 = arith.subf %47, %50 : vector<32x32xf32>
    %52 = math.exp %51 : vector<32x32xf32>
    %cst_33 = arith.constant dense<0.000000e+00> : vector<32xf32>
    %53 = vector.multi_reduction <add>, %52, %cst_33 [1] : vector<32x32xf32> to vector<32xf32>
    %54 = vector.shape_cast %53 : vector<32xf32> to vector<32x1xf32>
    %55 = tpu.reciprocal %54 {approx = true} : vector<32x1xf32> -> vector<32x1xf32>
    %56 = vector.broadcast %55 : vector<32x1xf32> to vector<32x32xf32>
    %57 = arith.mulf %52, %56 : vector<32x32xf32>
    %58 = vector.broadcast %43 : vector<1x32xf32> to vector<32x32xf32>
    %59 = arith.mulf %19, %58 : vector<32x32xf32>
    %cst_34 = arith.constant dense<0.000000e+00> : vector<32x32xf32>
    %60 = tpu.matmul %57, %59, %cst_34 {dimension_numbers = #tpu.dot_dimension_numbers<[1], [0], [0], [1], [0, 0, 1, 1], [], []>} : vector<32x32xf32>, vector<32x32xf32>, vector<32x32xf32> -> vector<32x32xf32>
    %61 = arith.addf %41, %60 : vector<32x32xf32>
    %c2 = arith.constant 2 : index
    %c0_35 = arith.constant 0 : index
    %c0_36 = arith.constant 0 : index
    %62 = vector.load %arg6[%c2, %c0_35, %c0_36] : memref<4x1x32xf32, #tpu.memory_space<vmem>>, vector<1x1x32xf32>
    %63 = vector.shape_cast %62 : vector<1x1x32xf32> to vector<1x32xf32>
    %64 = vector.broadcast %63 : vector<1x32xf32> to vector<32x32xf32>
    %65 = arith.mulf %9, %64 : vector<32x32xf32>
    %cst_37 = arith.constant dense<0.000000e+00> : vector<32x32xf32>
    %66 = tpu.matmul %65, %14, %cst_37 {dimension_numbers = #tpu.dot_dimension_numbers<[1], [1], [0], [0], [0, 0, 1, 0], [], []>} : vector<32x32xf32>, vector<32x32xf32>, vector<32x32xf32> -> vector<32x32xf32>
    %67 = arith.addf %66, %20 : vector<32x32xf32>
    %cst_38 = arith.constant dense<0xFF800000> : vector<32xf32>
    %68 = vector.multi_reduction <maximumf>, %67, %cst_38 [1] : vector<32x32xf32> to vector<32xf32>
    %69 = vector.shape_cast %68 : vector<32xf32> to vector<32x1xf32>
    %70 = vector.broadcast %69 : vector<32x1xf32> to vector<32x32xf32>
    %71 = arith.subf %67, %70 : vector<32x32xf32>
    %72 = math.exp %71 : vector<32x32xf32>
    %cst_39 = arith.constant dense<0.000000e+00> : vector<32xf32>
    %73 = vector.multi_reduction <add>, %72, %cst_39 [1] : vector<32x32xf32> to vector<32xf32>
    %74 = vector.shape_cast %73 : vector<32xf32> to vector<32x1xf32>
    %75 = tpu.reciprocal %74 {approx = true} : vector<32x1xf32> -> vector<32x1xf32>
    %76 = vector.broadcast %75 : vector<32x1xf32> to vector<32x32xf32>
    %77 = arith.mulf %72, %76 : vector<32x32xf32>
    %78 = vector.broadcast %63 : vector<1x32xf32> to vector<32x32xf32>
    %79 = arith.mulf %19, %78 : vector<32x32xf32>
    %cst_40 = arith.constant dense<0.000000e+00> : vector<32x32xf32>
    %80 = tpu.matmul %77, %79, %cst_40 {dimension_numbers = #tpu.dot_dimension_numbers<[1], [0], [0], [1], [0, 0, 1, 1], [], []>} : vector<32x32xf32>, vector<32x32xf32>, vector<32x32xf32> -> vector<32x32xf32>
    %81 = arith.addf %61, %80 : vector<32x32xf32>
    %c3 = arith.constant 3 : index
    %c0_41 = arith.constant 0 : index
    %c0_42 = arith.constant 0 : index
    %82 = vector.load %arg6[%c3, %c0_41, %c0_42] : memref<4x1x32xf32, #tpu.memory_space<vmem>>, vector<1x1x32xf32>
    %83 = vector.shape_cast %82 : vector<1x1x32xf32> to vector<1x32xf32>
    %84 = vector.broadcast %83 : vector<1x32xf32> to vector<32x32xf32>
    %85 = arith.mulf %9, %84 : vector<32x32xf32>
    %cst_43 = arith.constant dense<0.000000e+00> : vector<32x32xf32>
    %86 = tpu.matmul %85, %14, %cst_43 {dimension_numbers = #tpu.dot_dimension_numbers<[1], [1], [0], [0], [0, 0, 1, 0], [], []>} : vector<32x32xf32>, vector<32x32xf32>, vector<32x32xf32> -> vector<32x32xf32>
    %87 = arith.addf %86, %20 : vector<32x32xf32>
    %cst_44 = arith.constant dense<0xFF800000> : vector<32xf32>
    %88 = vector.multi_reduction <maximumf>, %87, %cst_44 [1] : vector<32x32xf32> to vector<32xf32>
    %89 = vector.shape_cast %88 : vector<32xf32> to vector<32x1xf32>
    %90 = vector.broadcast %89 : vector<32x1xf32> to vector<32x32xf32>
    %91 = arith.subf %87, %90 : vector<32x32xf32>
    %92 = math.exp %91 : vector<32x32xf32>
    %cst_45 = arith.constant dense<0.000000e+00> : vector<32xf32>
    %93 = vector.multi_reduction <add>, %92, %cst_45 [1] : vector<32x32xf32> to vector<32xf32>
    %94 = vector.shape_cast %93 : vector<32xf32> to vector<32x1xf32>
    %95 = tpu.reciprocal %94 {approx = true} : vector<32x1xf32> -> vector<32x1xf32>
    %96 = vector.broadcast %95 : vector<32x1xf32> to vector<32x32xf32>
    %97 = arith.mulf %92, %96 : vector<32x32xf32>
    %98 = vector.broadcast %83 : vector<1x32xf32> to vector<32x32xf32>
    %99 = arith.mulf %19, %98 : vector<32x32xf32>
    %cst_46 = arith.constant dense<0.000000e+00> : vector<32x32xf32>
    %100 = tpu.matmul %97, %99, %cst_46 {dimension_numbers = #tpu.dot_dimension_numbers<[1], [0], [0], [1], [0, 0, 1, 1], [], []>} : vector<32x32xf32>, vector<32x32xf32>, vector<32x32xf32> -> vector<32x32xf32>
    %101 = arith.addf %81, %100 : vector<32x32xf32>
    %c0_47 = arith.constant 0 : index
    %c0_48 = arith.constant 0 : index
    %102 = vector.load %arg13[%c0_47, %c0_48] : memref<32x32xf32, #tpu.memory_space<vmem>>, vector<32x32xf32>
    %cst_49 = arith.constant dense<0.000000e+00> : vector<32x32xf32>
    %103 = tpu.matmul %101, %102, %cst_49 {dimension_numbers = #tpu.dot_dimension_numbers<[1], [0], [0], [1], [0, 0, 1, 1], [], []>} : vector<32x32xf32>, vector<32x32xf32>, vector<32x32xf32> -> vector<32x32xf32>
    %c0_50 = arith.constant 0 : index
    %c0_51 = arith.constant 0 : index
    %104 = vector.load %arg14[%c0_50, %c0_51] : memref<1x32xf32, #tpu.memory_space<vmem>>, vector<1x32xf32>
    %105 = vector.broadcast %104 : vector<1x32xf32> to vector<32x32xf32>
    %106 = arith.addf %103, %105 : vector<32x32xf32>
    %c0_52 = arith.constant 0 : index
    %c0_53 = arith.constant 0 : index
    %107 = vector.load %arg16[%c0_52, %c0_53] : memref<32x32xf32, #tpu.memory_space<vmem>>, vector<32x32xf32>
    %cst_54 = arith.constant dense<0.000000e+00> : vector<32x32xf32>
    %108 = tpu.matmul %0, %107, %cst_54 {dimension_numbers = #tpu.dot_dimension_numbers<[1], [0], [0], [1], [0, 0, 1, 1], [], []>} : vector<32x32xf32>, vector<32x32xf32>, vector<32x32xf32> -> vector<32x32xf32>
    %c0_55 = arith.constant 0 : index
    %c0_56 = arith.constant 0 : index
    %109 = vector.load %arg17[%c0_55, %c0_56] : memref<1x32xf32, #tpu.memory_space<vmem>>, vector<1x32xf32>
    %110 = vector.broadcast %109 : vector<1x32xf32> to vector<32x32xf32>
    %111 = arith.addf %108, %110 : vector<32x32xf32>
    %c0_57 = arith.constant 0 : index
    %c0_58 = arith.constant 0 : index
    %112 = vector.load %arg4[%c0_57, %c0_58] : memref<288x32xf32, #tpu.memory_space<vmem>>, vector<288x32xf32>
    %c0_59 = arith.constant 0 : index
    %c0_60 = arith.constant 0 : index
    %113 = vector.load %arg15[%c0_59, %c0_60] : memref<32x32xf32, #tpu.memory_space<vmem>>, vector<32x32xf32>
    %cst_61 = arith.constant dense<0.000000e+00> : vector<288x32xf32>
    %114 = tpu.matmul %112, %113, %cst_61 {dimension_numbers = #tpu.dot_dimension_numbers<[1], [0], [0], [1], [0, 0, 1, 1], [], []>} : vector<288x32xf32>, vector<32x32xf32>, vector<288x32xf32> -> vector<288x32xf32>
    %115 = vector.extract_strided_slice %114 {offsets = [0, 0], sizes = [32, 32], strides = [1, 1]} : vector<288x32xf32> to vector<32x32xf32>
    %116 = arith.addf %115, %111 : vector<32x32xf32>
    %cst_62 = arith.constant 0.000000e+00 : f32
    %117 = vector.broadcast %cst_62 : f32 to vector<32x32xf32>
    %118 = arith.cmpf oge, %116, %117 : vector<32x32xf32>
    %cst_63 = arith.constant 2.000000e-01 : f32
    %119 = vector.broadcast %cst_63 : f32 to vector<32x32xf32>
    %120 = arith.mulf %119, %116 : vector<32x32xf32>
    %121 = arith.select %118, %116, %120 : vector<32x32xi1>, vector<32x32xf32>
    %122 = vector.extract_strided_slice %114 {offsets = [32, 0], sizes = [32, 32], strides = [1, 1]} : vector<288x32xf32> to vector<32x32xf32>
    %123 = arith.addf %122, %111 : vector<32x32xf32>
    %cst_64 = arith.constant 0.000000e+00 : f32
    %124 = vector.broadcast %cst_64 : f32 to vector<32x32xf32>
    %125 = arith.cmpf oge, %123, %124 : vector<32x32xf32>
    %cst_65 = arith.constant 2.000000e-01 : f32
    %126 = vector.broadcast %cst_65 : f32 to vector<32x32xf32>
    %127 = arith.mulf %126, %123 : vector<32x32xf32>
    %128 = arith.select %125, %123, %127 : vector<32x32xi1>, vector<32x32xf32>
    %129 = arith.maximumf %121, %128 : vector<32x32xf32>
    %130 = vector.extract_strided_slice %114 {offsets = [64, 0], sizes = [32, 32], strides = [1, 1]} : vector<288x32xf32> to vector<32x32xf32>
    %131 = arith.addf %130, %111 : vector<32x32xf32>
    %cst_66 = arith.constant 0.000000e+00 : f32
    %132 = vector.broadcast %cst_66 : f32 to vector<32x32xf32>
    %133 = arith.cmpf oge, %131, %132 : vector<32x32xf32>
    %cst_67 = arith.constant 2.000000e-01 : f32
    %134 = vector.broadcast %cst_67 : f32 to vector<32x32xf32>
    %135 = arith.mulf %134, %131 : vector<32x32xf32>
    %136 = arith.select %133, %131, %135 : vector<32x32xi1>, vector<32x32xf32>
    %137 = arith.maximumf %129, %136 : vector<32x32xf32>
    %138 = vector.extract_strided_slice %114 {offsets = [96, 0], sizes = [32, 32], strides = [1, 1]} : vector<288x32xf32> to vector<32x32xf32>
    %139 = arith.addf %138, %111 : vector<32x32xf32>
    %cst_68 = arith.constant 0.000000e+00 : f32
    %140 = vector.broadcast %cst_68 : f32 to vector<32x32xf32>
    %141 = arith.cmpf oge, %139, %140 : vector<32x32xf32>
    %cst_69 = arith.constant 2.000000e-01 : f32
    %142 = vector.broadcast %cst_69 : f32 to vector<32x32xf32>
    %143 = arith.mulf %142, %139 : vector<32x32xf32>
    %144 = arith.select %141, %139, %143 : vector<32x32xi1>, vector<32x32xf32>
    %145 = arith.maximumf %137, %144 : vector<32x32xf32>
    %146 = vector.extract_strided_slice %114 {offsets = [128, 0], sizes = [32, 32], strides = [1, 1]} : vector<288x32xf32> to vector<32x32xf32>
    %147 = arith.addf %146, %111 : vector<32x32xf32>
    %cst_70 = arith.constant 0.000000e+00 : f32
    %148 = vector.broadcast %cst_70 : f32 to vector<32x32xf32>
    %149 = arith.cmpf oge, %147, %148 : vector<32x32xf32>
    %cst_71 = arith.constant 2.000000e-01 : f32
    %150 = vector.broadcast %cst_71 : f32 to vector<32x32xf32>
    %151 = arith.mulf %150, %147 : vector<32x32xf32>
    %152 = arith.select %149, %147, %151 : vector<32x32xi1>, vector<32x32xf32>
    %153 = arith.maximumf %145, %152 : vector<32x32xf32>
    %154 = vector.extract_strided_slice %114 {offsets = [160, 0], sizes = [32, 32], strides = [1, 1]} : vector<288x32xf32> to vector<32x32xf32>
    %155 = arith.addf %154, %111 : vector<32x32xf32>
    %cst_72 = arith.constant 0.000000e+00 : f32
    %156 = vector.broadcast %cst_72 : f32 to vector<32x32xf32>
    %157 = arith.cmpf oge, %155, %156 : vector<32x32xf32>
    %cst_73 = arith.constant 2.000000e-01 : f32
    %158 = vector.broadcast %cst_73 : f32 to vector<32x32xf32>
    %159 = arith.mulf %158, %155 : vector<32x32xf32>
    %160 = arith.select %157, %155, %159 : vector<32x32xi1>, vector<32x32xf32>
    %161 = arith.maximumf %153, %160 : vector<32x32xf32>
    %162 = vector.extract_strided_slice %114 {offsets = [192, 0], sizes = [32, 32], strides = [1, 1]} : vector<288x32xf32> to vector<32x32xf32>
    %163 = arith.addf %162, %111 : vector<32x32xf32>
    %cst_74 = arith.constant 0.000000e+00 : f32
    %164 = vector.broadcast %cst_74 : f32 to vector<32x32xf32>
    %165 = arith.cmpf oge, %163, %164 : vector<32x32xf32>
    %cst_75 = arith.constant 2.000000e-01 : f32
    %166 = vector.broadcast %cst_75 : f32 to vector<32x32xf32>
    %167 = arith.mulf %166, %163 : vector<32x32xf32>
    %168 = arith.select %165, %163, %167 : vector<32x32xi1>, vector<32x32xf32>
    %169 = arith.maximumf %161, %168 : vector<32x32xf32>
    %170 = vector.extract_strided_slice %114 {offsets = [224, 0], sizes = [32, 32], strides = [1, 1]} : vector<288x32xf32> to vector<32x32xf32>
    %171 = arith.addf %170, %111 : vector<32x32xf32>
    %cst_76 = arith.constant 0.000000e+00 : f32
    %172 = vector.broadcast %cst_76 : f32 to vector<32x32xf32>
    %173 = arith.cmpf oge, %171, %172 : vector<32x32xf32>
    %cst_77 = arith.constant 2.000000e-01 : f32
    %174 = vector.broadcast %cst_77 : f32 to vector<32x32xf32>
    %175 = arith.mulf %174, %171 : vector<32x32xf32>
    %176 = arith.select %173, %171, %175 : vector<32x32xi1>, vector<32x32xf32>
    %177 = arith.maximumf %169, %176 : vector<32x32xf32>
    %178 = vector.extract_strided_slice %114 {offsets = [256, 0], sizes = [32, 32], strides = [1, 1]} : vector<288x32xf32> to vector<32x32xf32>
    %179 = arith.addf %178, %111 : vector<32x32xf32>
    %cst_78 = arith.constant 0.000000e+00 : f32
    %180 = vector.broadcast %cst_78 : f32 to vector<32x32xf32>
    %181 = arith.cmpf oge, %179, %180 : vector<32x32xf32>
    %cst_79 = arith.constant 2.000000e-01 : f32
    %182 = vector.broadcast %cst_79 : f32 to vector<32x32xf32>
    %183 = arith.mulf %182, %179 : vector<32x32xf32>
    %184 = arith.select %181, %179, %183 : vector<32x32xi1>, vector<32x32xf32>
    %185 = arith.maximumf %177, %184 : vector<32x32xf32>
    %c0_80 = arith.constant 0 : index
    %c0_81 = arith.constant 0 : index
    %186 = vector.load %arg18[%c0_80, %c0_81] : memref<32x32xf32, #tpu.memory_space<vmem>>, vector<32x32xf32>
    %cst_82 = arith.constant dense<0.000000e+00> : vector<32x32xf32>
    %187 = tpu.matmul %106, %186, %cst_82 {dimension_numbers = #tpu.dot_dimension_numbers<[1], [0], [0], [1], [0, 0, 1, 1], [], []>} : vector<32x32xf32>, vector<32x32xf32>, vector<32x32xf32> -> vector<32x32xf32>
    %c0_83 = arith.constant 0 : index
    %c0_84 = arith.constant 0 : index
    %188 = vector.load %arg19[%c0_83, %c0_84] : memref<32x32xf32, #tpu.memory_space<vmem>>, vector<32x32xf32>
    %cst_85 = arith.constant dense<0.000000e+00> : vector<32x32xf32>
    %189 = tpu.matmul %185, %188, %cst_85 {dimension_numbers = #tpu.dot_dimension_numbers<[1], [0], [0], [1], [0, 0, 1, 1], [], []>} : vector<32x32xf32>, vector<32x32xf32>, vector<32x32xf32> -> vector<32x32xf32>
    %190 = arith.addf %187, %189 : vector<32x32xf32>
    %c0_86 = arith.constant 0 : index
    %c0_87 = arith.constant 0 : index
    %191 = vector.load %arg20[%c0_86, %c0_87] : memref<1x32xf32, #tpu.memory_space<vmem>>, vector<1x32xf32>
    %192 = vector.broadcast %191 : vector<1x32xf32> to vector<32x32xf32>
    %193 = arith.addf %190, %192 : vector<32x32xf32>
    %194 = arith.addf %0, %193 : vector<32x32xf32>
    %c0_88 = arith.constant 0 : index
    %c0_89 = arith.constant 0 : index
    %195 = vector.load %arg25[%c0_88, %c0_89] : memref<1x32xf32, #tpu.memory_space<vmem>>, vector<1x32xf32>
    %c0_90 = arith.constant 0 : index
    %c0_91 = arith.constant 0 : index
    %196 = vector.load %arg26[%c0_90, %c0_91] : memref<1x32xf32, #tpu.memory_space<vmem>>, vector<1x32xf32>
    %cst_92 = arith.constant dense<0.000000e+00> : vector<32xf32>
    %197 = vector.multi_reduction <add>, %194, %cst_92 [1] : vector<32x32xf32> to vector<32xf32>
    %198 = vector.shape_cast %197 : vector<32xf32> to vector<32x1xf32>
    %cst_93 = arith.constant 3.200000e+01 : f32
    %199 = vector.broadcast %cst_93 : f32 to vector<32x1xf32>
    %200 = arith.divf %198, %199 : vector<32x1xf32>
    %201 = vector.broadcast %200 : vector<32x1xf32> to vector<32x32xf32>
    %202 = arith.subf %194, %201 : vector<32x32xf32>
    %203 = arith.mulf %202, %202 : vector<32x32xf32>
    %cst_94 = arith.constant dense<0.000000e+00> : vector<32xf32>
    %204 = vector.multi_reduction <add>, %203, %cst_94 [1] : vector<32x32xf32> to vector<32xf32>
    %205 = vector.shape_cast %204 : vector<32xf32> to vector<32x1xf32>
    %cst_95 = arith.constant 3.200000e+01 : f32
    %206 = vector.broadcast %cst_95 : f32 to vector<32x1xf32>
    %207 = arith.divf %205, %206 : vector<32x1xf32>
    %cst_96 = arith.constant 9.99999974E-6 : f32
    %208 = vector.broadcast %cst_96 : f32 to vector<32x1xf32>
    %209 = arith.addf %207, %208 : vector<32x1xf32>
    %210 = math.rsqrt %209 : vector<32x1xf32>
    %211 = vector.broadcast %210 : vector<32x1xf32> to vector<32x32xf32>
    %212 = arith.mulf %202, %211 : vector<32x32xf32>
    %213 = vector.broadcast %195 : vector<1x32xf32> to vector<32x32xf32>
    %214 = arith.mulf %212, %213 : vector<32x32xf32>
    %215 = vector.broadcast %196 : vector<1x32xf32> to vector<32x32xf32>
    %216 = arith.addf %214, %215 : vector<32x32xf32>
    %c0_97 = arith.constant 0 : index
    %c0_98 = arith.constant 0 : index
    %217 = vector.load %arg21[%c0_97, %c0_98] : memref<32x64xf32, #tpu.memory_space<vmem>>, vector<32x64xf32>
    %cst_99 = arith.constant dense<0.000000e+00> : vector<32x64xf32>
    %218 = tpu.matmul %216, %217, %cst_99 {dimension_numbers = #tpu.dot_dimension_numbers<[1], [0], [0], [1], [0, 0, 1, 1], [], []>} : vector<32x32xf32>, vector<32x64xf32>, vector<32x64xf32> -> vector<32x64xf32>
    %c0_100 = arith.constant 0 : index
    %c0_101 = arith.constant 0 : index
    %219 = vector.load %arg22[%c0_100, %c0_101] : memref<1x64xf32, #tpu.memory_space<vmem>>, vector<1x64xf32>
    %220 = vector.broadcast %219 : vector<1x64xf32> to vector<32x64xf32>
    %221 = arith.addf %218, %220 : vector<32x64xf32>
    %cst_102 = arith.constant 0.000000e+00 : f32
    %222 = vector.broadcast %cst_102 : f32 to vector<32x64xf32>
    %223 = arith.maximumf %221, %222 : vector<32x64xf32>
    %c0_103 = arith.constant 0 : index
    %c0_104 = arith.constant 0 : index
    %224 = vector.load %arg23[%c0_103, %c0_104] : memref<64x32xf32, #tpu.memory_space<vmem>>, vector<64x32xf32>
    %cst_105 = arith.constant dense<0.000000e+00> : vector<32x32xf32>
    %225 = tpu.matmul %223, %224, %cst_105 {dimension_numbers = #tpu.dot_dimension_numbers<[1], [0], [0], [1], [0, 0, 1, 1], [], []>} : vector<32x64xf32>, vector<64x32xf32>, vector<32x32xf32> -> vector<32x32xf32>
    %c0_106 = arith.constant 0 : index
    %c0_107 = arith.constant 0 : index
    %226 = vector.load %arg24[%c0_106, %c0_107] : memref<1x32xf32, #tpu.memory_space<vmem>>, vector<1x32xf32>
    %227 = vector.broadcast %226 : vector<1x32xf32> to vector<32x32xf32>
    %228 = arith.addf %225, %227 : vector<32x32xf32>
    %229 = arith.addf %216, %228 : vector<32x32xf32>
    %c0_108 = arith.constant 0 : index
    %c0_109 = arith.constant 0 : index
    %230 = vector.load %arg27[%c0_108, %c0_109] : memref<1x32xf32, #tpu.memory_space<vmem>>, vector<1x32xf32>
    %c0_110 = arith.constant 0 : index
    %c0_111 = arith.constant 0 : index
    %231 = vector.load %arg28[%c0_110, %c0_111] : memref<1x32xf32, #tpu.memory_space<vmem>>, vector<1x32xf32>
    %cst_112 = arith.constant dense<0.000000e+00> : vector<32xf32>
    %232 = vector.multi_reduction <add>, %229, %cst_112 [1] : vector<32x32xf32> to vector<32xf32>
    %233 = vector.shape_cast %232 : vector<32xf32> to vector<32x1xf32>
    %cst_113 = arith.constant 3.200000e+01 : f32
    %234 = vector.broadcast %cst_113 : f32 to vector<32x1xf32>
    %235 = arith.divf %233, %234 : vector<32x1xf32>
    %236 = vector.broadcast %235 : vector<32x1xf32> to vector<32x32xf32>
    %237 = arith.subf %229, %236 : vector<32x32xf32>
    %238 = arith.mulf %237, %237 : vector<32x32xf32>
    %cst_114 = arith.constant dense<0.000000e+00> : vector<32xf32>
    %239 = vector.multi_reduction <add>, %238, %cst_114 [1] : vector<32x32xf32> to vector<32xf32>
    %240 = vector.shape_cast %239 : vector<32xf32> to vector<32x1xf32>
    %cst_115 = arith.constant 3.200000e+01 : f32
    %241 = vector.broadcast %cst_115 : f32 to vector<32x1xf32>
    %242 = arith.divf %240, %241 : vector<32x1xf32>
    %cst_116 = arith.constant 9.99999974E-6 : f32
    %243 = vector.broadcast %cst_116 : f32 to vector<32x1xf32>
    %244 = arith.addf %242, %243 : vector<32x1xf32>
    %245 = math.rsqrt %244 : vector<32x1xf32>
    %246 = vector.broadcast %245 : vector<32x1xf32> to vector<32x32xf32>
    %247 = arith.mulf %237, %246 : vector<32x32xf32>
    %248 = vector.broadcast %230 : vector<1x32xf32> to vector<32x32xf32>
    %249 = arith.mulf %247, %248 : vector<32x32xf32>
    %250 = vector.broadcast %231 : vector<1x32xf32> to vector<32x32xf32>
    %251 = arith.addf %249, %250 : vector<32x32xf32>
    %c0_117 = arith.constant 0 : index
    %c0_118 = arith.constant 0 : index
    %252 = vector.load %arg29[%c0_117, %c0_118] : memref<32x32xf32, #tpu.memory_space<vmem>>, vector<32x32xf32>
    tpu.vector_store %arg29[%c0_117, %c0_118], %251 {strides = array<i32>} : memref<32x32xf32, #tpu.memory_space<vmem>>, vector<32x32xf32>,
    return
  }
  func.func @transform_0(%arg0: i32) -> (i32, i32) {
    %c0_i32 = arith.constant 0 : i32
    %c0_i32_0 = arith.constant 0 : i32
    %c0_i32_1 = arith.constant 0 : i32
    return %c0_i32, %c0_i32_0 : i32, i32
  }
  func.func @transform_1(%arg0: i32) -> (i32, i32) {
    %c0_i32 = arith.constant 0 : i32
    %c0_i32_0 = arith.constant 0 : i32
    %c0_i32_1 = arith.constant 0 : i32
    return %c0_i32, %c0_i32_0 : i32, i32
  }
  func.func @transform_2(%arg0: i32) -> (i32, i32) {
    %c0_i32 = arith.constant 0 : i32
    %c0_i32_0 = arith.constant 0 : i32
    %c0_i32_1 = arith.constant 0 : i32
    return %c0_i32, %c0_i32_0 : i32, i32
  }
  func.func @transform_3(%arg0: i32) -> (i32, i32) {
    %c0_i32 = arith.constant 0 : i32
    %c0_i32_0 = arith.constant 0 : i32
    %c0_i32_1 = arith.constant 0 : i32
    return %c0_i32, %c0_i32_0 : i32, i32
  }
  func.func @transform_4(%arg0: i32) -> (i32, i32) {
    %c0_i32 = arith.constant 0 : i32
    %c0_i32_0 = arith.constant 0 : i32
    %c0_i32_1 = arith.constant 0 : i32
    return %c0_i32, %c0_i32_0 : i32, i32
  }
  func.func @transform_5(%arg0: i32) -> (i32, i32, i32) {
    %c0_i32 = arith.constant 0 : i32
    %c0_i32_0 = arith.constant 0 : i32
    %c0_i32_1 = arith.constant 0 : i32
    %c0_i32_2 = arith.constant 0 : i32
    return %c0_i32, %c0_i32_0, %c0_i32_1 : i32, i32, i32
  }
  func.func @transform_6(%arg0: i32) -> (i32, i32) {
    %c0_i32 = arith.constant 0 : i32
    %c0_i32_0 = arith.constant 0 : i32
    %c0_i32_1 = arith.constant 0 : i32
    return %c0_i32, %c0_i32_0 : i32, i32
  }
  func.func @transform_7(%arg0: i32) -> (i32, i32) {
    %c0_i32 = arith.constant 0 : i32
    %c0_i32_0 = arith.constant 0 : i32
    %c0_i32_1 = arith.constant 0 : i32
    return %c0_i32, %c0_i32_0 : i32, i32
  }
  func.func @transform_8(%arg0: i32) -> (i32, i32) {
    %c0_i32 = arith.constant 0 : i32
    %c0_i32_0 = arith.constant 0 : i32
    %c0_i32_1 = arith.constant 0 : i32
    return %c0_i32, %c0_i32_0 : i32, i32
  }
  func.func @transform_9(%arg0: i32) -> (i32, i32) {
    %c0_i32 = arith.constant 0 : i32
    %c0_i32_0 = arith.constant 0 : i32
    %c0_i32_1 = arith.constant 0 : i32
    return %c0_i32, %c0_i32_0 : i32, i32
  }
  func.func @transform_10(%arg0: i32) -> (i32, i32) {
    %c0_i32 = arith.constant 0 : i32
    %c0_i32_0 = arith.constant 0 : i32
    %c0_i32_1 = arith.constant 0 : i32
    return %c0_i32, %c0_i32_0 : i32, i32
  }
  func.func @transform_11(%arg0: i32) -> (i32, i32) {
    %c0_i32 = arith.constant 0 : i32
    %c0_i32_0 = arith.constant 0 : i32
    %c0_i32_1 = arith.constant 0 : i32
    return %c0_i32, %c0_i32_0 : i32, i32
  }
  func.func @transform_12(%arg0: i32) -> (i32, i32) {
    %c0_i32 = arith.constant 0 : i32
    %c0_i32_0 = arith.constant 0 : i32
    %c0_i32_1 = arith.constant 0 : i32
    return %c0_i32, %c0_i32_0 : i32, i32
  }
  func.func @transform_13(%arg0: i32) -> (i32, i32) {
    %c0_i32 = arith.constant 0 : i32
    %c0_i32_0 = arith.constant 0 : i32
    %c0_i32_1 = arith.constant 0 : i32
    return %c0_i32, %c0_i32_0 : i32, i32
  }
  func.func @transform_14(%arg0: i32) -> (i32, i32) {
    %c0_i32 = arith.constant 0 : i32
    %c0_i32_0 = arith.constant 0 : i32
    %c0_i32_1 = arith.constant 0 : i32
    return %c0_i32, %c0_i32_0 : i32, i32
  }
  func.func @transform_15(%arg0: i32) -> (i32, i32) {
    %c0_i32 = arith.constant 0 : i32
    %c0_i32_0 = arith.constant 0 : i32
    %c0_i32_1 = arith.constant 0 : i32
    return %c0_i32, %c0_i32_0 : i32, i32
  }
  func.func @transform_16(%arg0: i32) -> (i32, i32) {
    %c0_i32 = arith.constant 0 : i32
    %c0_i32_0 = arith.constant 0 : i32
    %c0_i32_1 = arith.constant 0 : i32
    return %c0_i32, %c0_i32_0 : i32, i32
  }
  func.func @transform_17(%arg0: i32) -> (i32, i32) {
    %c0_i32 = arith.constant 0 : i32
    %c0_i32_0 = arith.constant 0 : i32
    %c0_i32_1 = arith.constant 0 : i32
    return %c0_i32, %c0_i32_0 : i32, i32
  }
  func.func @transform_18(%arg0: i32) -> (i32, i32) {
    %c0_i32 = arith.constant 0 : i32
    %c0_i32_0 = arith.constant 0 : i32
    %c0_i32_1 = arith.constant 0 : i32
    return %c0_i32, %c0_i32_0 : i32, i32
  }
  func.func @transform_19(%arg0: i32) -> (i32, i32) {
    %c0_i32 = arith.constant 0 : i32
    %c0_i32_0 = arith.constant 0 : i32
    %c0_i32_1 = arith.constant 0 : i32
    return %c0_i32, %c0_i32_0 : i32, i32
  }
  func.func @transform_20(%arg0: i32) -> (i32, i32) {
    %c0_i32 = arith.constant 0 : i32
    %c0_i32_0 = arith.constant 0 : i32
    %c0_i32_1 = arith.constant 0 : i32
    return %c0_i32, %c0_i32_0 : i32, i32
  }
  func.func @transform_21(%arg0: i32) -> (i32, i32) {
    %c0_i32 = arith.constant 0 : i32
    %c0_i32_0 = arith.constant 0 : i32
    %c0_i32_1 = arith.constant 0 : i32
    return %c0_i32, %c0_i32_0 : i32, i32
  }
  func.func @transform_22(%arg0: i32) -> (i32, i32) {
    %c0_i32 = arith.constant 0 : i32
    %c0_i32_0 = arith.constant 0 : i32
    %c0_i32_1 = arith.constant 0 : i32
    return %c0_i32, %c0_i32_0 : i32, i32
  }
  func.func @transform_23(%arg0: i32) -> (i32, i32) {
    %c0_i32 = arith.constant 0 : i32
    %c0_i32_0 = arith.constant 0 : i32
    %c0_i32_1 = arith.constant 0 : i32
    return %c0_i32, %c0_i32_0 : i32, i32
  }
  func.func @transform_24(%arg0: i32) -> (i32, i32) {
    %c0_i32 = arith.constant 0 : i32
    %c0_i32_0 = arith.constant 0 : i32
    %c0_i32_1 = arith.constant 0 : i32
    return %c0_i32, %c0_i32_0 : i32, i32
  }
  func.func @transform_25(%arg0: i32) -> (i32, i32) {
    %c0_i32 = arith.constant 0 : i32
    %c0_i32_0 = arith.constant 0 : i32
    %c0_i32_1 = arith.constant 0 : i32
    return %c0_i32, %c0_i32_0 : i32, i32
  }
  func.func @transform_26(%arg0: i32) -> (i32, i32) {
    %c0_i32 = arith.constant 0 : i32
    %c0_i32_0 = arith.constant 0 : i32
    %c0_i32_1 = arith.constant 0 : i32
    return %c0_i32, %c0_i32_0 : i32, i32
  }
  func.func @transform_27(%arg0: i32) -> (i32, i32) {
    %c0_i32 = arith.constant 0 : i32
    %c0_i32_0 = arith.constant 0 : i32
    %c0_i32_1 = arith.constant 0 : i32
    return %c0_i32, %c0_i32_0 : i32, i32
  }
  func.func @transform_28(%arg0: i32) -> (i32, i32) {
    %c0_i32 = arith.constant 0 : i32
    %c0_i32_0 = arith.constant 0 : i32
    %c0_i32_1 = arith.constant 0 : i32
    return %c0_i32, %c0_i32_0 : i32, i32
  }
}

</mosaic_0001>

<llo_original>
// kernel: encoder_layer_forward.1
$region0: #{encoder_layer_forward.1}
  #allocation0 [shape = 'u32[]', space=smem, size = 0x4, offset = 0x4, fixed_abs, tag = 'smem constant byte address 0x4 - core index']
  #allocation1 [shape = 'u32[72,128]{1,0:T(1,128)}', space=vmem, size = 0x9000, scoped, tag = 'internal scratch']
  %s0 = inlined_call_operand.vmem [shape: f32[32,32], index: 0, kind: input, shape index: {}]
  %s1 = inlined_call_operand.vmem [shape: f32[32,32], index: 1, kind: input, shape index: {}]
  %s2 = inlined_call_operand.vmem [shape: f32[32,32], index: 2, kind: input, shape index: {}]
  %s3 = inlined_call_operand.vmem [shape: f32[288,32], index: 3, kind: input, shape index: {}]
  %s4 = inlined_call_operand.vmem [shape: f32[32,32], index: 4, kind: input, shape index: {}]
  %s5 = inlined_call_operand.vmem [shape: f32[4,1,32], index: 5, kind: input, shape index: {}]
  %s6 = inlined_call_operand.vmem [shape: f32[32,32], index: 6, kind: input, shape index: {}]
  %s7 = inlined_call_operand.vmem [shape: f32[1,32], index: 7, kind: input, shape index: {}]
  %s8 = inlined_call_operand.vmem [shape: f32[32,32], index: 8, kind: input, shape index: {}]
  %s9 = inlined_call_operand.vmem [shape: f32[1,32], index: 9, kind: input, shape index: {}]
  %s10 = inlined_call_operand.vmem [shape: f32[32,32], index: 10, kind: input, shape index: {}]
  %s11 = inlined_call_operand.vmem [shape: f32[1,32], index: 11, kind: input, shape index: {}]
  %s12 = inlined_call_operand.vmem [shape: f32[32,32], index: 12, kind: input, shape index: {}]
  %s13 = inlined_call_operand.vmem [shape: f32[1,32], index: 13, kind: input, shape index: {}]
  %s14 = inlined_call_operand.vmem [shape: f32[32,32], index: 14, kind: input, shape index: {}]
  %s15 = inlined_call_operand.vmem [shape: f32[32,32], index: 15, kind: input, shape index: {}]
  %s16 = inlined_call_operand.vmem [shape: f32[1,32], index: 16, kind: input, shape index: {}]
  %s17 = inlined_call_operand.vmem [shape: f32[32,32], index: 17, kind: input, shape index: {}]
  %s18 = inlined_call_operand.vmem [shape: f32[32,32], index: 18, kind: input, shape index: {}]
  %s19 = inlined_call_operand.vmem [shape: f32[1,32], index: 19, kind: input, shape index: {}]
  %s20 = inlined_call_operand.vmem [shape: f32[32,64], index: 20, kind: input, shape index: {}]
  %s21 = inlined_call_operand.vmem [shape: f32[1,64], index: 21, kind: input, shape index: {}]
  %s22 = inlined_call_operand.vmem [shape: f32[64,32], index: 22, kind: input, shape index: {}]
  %s23 = inlined_call_operand.vmem [shape: f32[1,32], index: 23, kind: input, shape index: {}]
  %s24 = inlined_call_operand.vmem [shape: f32[1,32], index: 24, kind: input, shape index: {}]
  %s25 = inlined_call_operand.vmem [shape: f32[1,32], index: 25, kind: input, shape index: {}]
  %s26 = inlined_call_operand.vmem [shape: f32[1,32], index: 26, kind: input, shape index: {}]
  %s27 = inlined_call_operand.vmem [shape: f32[1,32], index: 27, kind: input, shape index: {}]
  %s28 = inlined_call_operand.vmem [shape: f32[32,32], index: 28, kind: output, shape index: {}]
  %s29 = sld [smem:[#allocation0]]
  $region122: #{encoder_layer_forward.1} parent=0
    _
  %s31 = ssub.s32 1, %s29
  %s32 = scalar_select 0, %s31, %s29
  // Predicated region
  $region2: #{encoder_layer_forward.1} parent=0 // pred_check
    _
  $region3: #{encoder_layer_forward.1} parent=0 // pred_check_branch
    %34 = sbr.rel (0) target = $region5
  $region4: #{encoder_layer_forward.1} parent=0 // pred_region
    _
  $region5: #{encoder_layer_forward.1} parent=0 // pred_fallthru
    _
  // Predicated region
  $region6: #{encoder_layer_forward.1} parent=0 // pred_check
    _
  $region7: #{encoder_layer_forward.1} parent=0 // pred_check_branch
    %36 = sbr.rel (0) target = $region9
  $region8: #{encoder_layer_forward.1} parent=0 // pred_region
    _
  $region9: #{encoder_layer_forward.1} parent=0 // pred_fallthru
    _
  // Predicated region
  $region10: #{encoder_layer_forward.1} parent=0 // pred_check
    _
  $region11: #{encoder_layer_forward.1} parent=0 // pred_check_branch
    %38 = sbr.rel (0) target = $region13
  $region12: #{encoder_layer_forward.1} parent=0 // pred_region
    _
  $region13: #{encoder_layer_forward.1} parent=0 // pred_fallthru
    _
  // Predicated region
  $region14: #{encoder_layer_forward.1} parent=0 // pred_check
    _
  $region15: #{encoder_layer_forward.1} parent=0 // pred_check_branch
    %40 = sbr.rel (0) target = $region17
  $region16: #{encoder_layer_forward.1} parent=0 // pred_region
    _
  $region17: #{encoder_layer_forward.1} parent=0 // pred_fallthru
    _
  // Predicated region
  $region18: #{encoder_layer_forward.1} parent=0 // pred_check
    _
  $region19: #{encoder_layer_forward.1} parent=0 // pred_check_branch
    %42 = sbr.rel (0) target = $region21
  $region20: #{encoder_layer_forward.1} parent=0 // pred_region
    _
  $region21: #{encoder_layer_forward.1} parent=0 // pred_fallthru
    _
  // Predicated region
  $region22: #{encoder_layer_forward.1} parent=0 // pred_check
    _
  $region23: #{encoder_layer_forward.1} parent=0 // pred_check_branch
    %44 = sbr.rel (0) target = $region25
  $region24: #{encoder_layer_forward.1} parent=0 // pred_region
    _
  $region25: #{encoder_layer_forward.1} parent=0 // pred_fallthru
    _
  // Predicated region
  $region26: #{encoder_layer_forward.1} parent=0 // pred_check
    _
  $region27: #{encoder_layer_forward.1} parent=0 // pred_check_branch
    %46 = sbr.rel (0) target = $region29
  $region28: #{encoder_layer_forward.1} parent=0 // pred_region
    _
  $region29: #{encoder_layer_forward.1} parent=0 // pred_fallthru
    _
  // Predicated region
  $region30: #{encoder_layer_forward.1} parent=0 // pred_check
    _
  $region31: #{encoder_layer_forward.1} parent=0 // pred_check_branch
    %48 = sbr.rel (0) target = $region33
  $region32: #{encoder_layer_forward.1} parent=0 // pred_region
    _
  $region33: #{encoder_layer_forward.1} parent=0 // pred_fallthru
    _
  // Predicated region
  $region34: #{encoder_layer_forward.1} parent=0 // pred_check
    _
  $region35: #{encoder_layer_forward.1} parent=0 // pred_check_branch
    %50 = sbr.rel (0) target = $region37
  $region36: #{encoder_layer_forward.1} parent=0 // pred_region
    _
  $region37: #{encoder_layer_forward.1} parent=0 // pred_fallthru
    _
  // Predicated region
  $region38: #{encoder_layer_forward.1} parent=0 // pred_check
    _
  $region39: #{encoder_layer_forward.1} parent=0 // pred_check_branch
    %52 = sbr.rel (0) target = $region41
  $region40: #{encoder_layer_forward.1} parent=0 // pred_region
    _
  $region41: #{encoder_layer_forward.1} parent=0 // pred_fallthru
    _
  // Predicated region
  $region42: #{encoder_layer_forward.1} parent=0 // pred_check
    _
  $region43: #{encoder_layer_forward.1} parent=0 // pred_check_branch
    %54 = sbr.rel (0) target = $region45
  $region44: #{encoder_layer_forward.1} parent=0 // pred_region
    _
  $region45: #{encoder_layer_forward.1} parent=0 // pred_fallthru
    _
  // Predicated region
  $region46: #{encoder_layer_forward.1} parent=0 // pred_check
    _
  $region47: #{encoder_layer_forward.1} parent=0 // pred_check_branch
    %56 = sbr.rel (0) target = $region49
  $region48: #{encoder_layer_forward.1} parent=0 // pred_region
    _
  $region49: #{encoder_layer_forward.1} parent=0 // pred_fallthru
    _
  // Predicated region
  $region50: #{encoder_layer_forward.1} parent=0 // pred_check
    _
  $region51: #{encoder_layer_forward.1} parent=0 // pred_check_branch
    %58 = sbr.rel (0) target = $region53
  $region52: #{encoder_layer_forward.1} parent=0 // pred_region
    _
  $region53: #{encoder_layer_forward.1} parent=0 // pred_fallthru
    _
  // Predicated region
  $region54: #{encoder_layer_forward.1} parent=0 // pred_check
    _
  $region55: #{encoder_layer_forward.1} parent=0 // pred_check_branch
    %60 = sbr.rel (0) target = $region57
  $region56: #{encoder_layer_forward.1} parent=0 // pred_region
    _
  $region57: #{encoder_layer_forward.1} parent=0 // pred_fallthru
    _
  // Predicated region
  $region58: #{encoder_layer_forward.1} parent=0 // pred_check
    _
  $region59: #{encoder_layer_forward.1} parent=0 // pred_check_branch
    %62 = sbr.rel (0) target = $region61
  $region60: #{encoder_layer_forward.1} parent=0 // pred_region
    _
  $region61: #{encoder_layer_forward.1} parent=0 // pred_fallthru
    _
  // Predicated region
  $region62: #{encoder_layer_forward.1} parent=0 // pred_check
    _
  $region63: #{encoder_layer_forward.1} parent=0 // pred_check_branch
    %64 = sbr.rel (0) target = $region65
  $region64: #{encoder_layer_forward.1} parent=0 // pred_region
    _
  $region65: #{encoder_layer_forward.1} parent=0 // pred_fallthru
    _
  // Predicated region
  $region66: #{encoder_layer_forward.1} parent=0 // pred_check
    _
  $region67: #{encoder_layer_forward.1} parent=0 // pred_check_branch
    %66 = sbr.rel (0) target = $region69
  $region68: #{encoder_layer_forward.1} parent=0 // pred_region
    _
  $region69: #{encoder_layer_forward.1} parent=0 // pred_fallthru
    _
  // Predicated region
  $region70: #{encoder_layer_forward.1} parent=0 // pred_check
    _
  $region71: #{encoder_layer_forward.1} parent=0 // pred_check_branch
    %68 = sbr.rel (0) target = $region73
  $region72: #{encoder_layer_forward.1} parent=0 // pred_region
    _
  $region73: #{encoder_layer_forward.1} parent=0 // pred_fallthru
    _
  // Predicated region
  $region74: #{encoder_layer_forward.1} parent=0 // pred_check
    _
  $region75: #{encoder_layer_forward.1} parent=0 // pred_check_branch
    %70 = sbr.rel (0) target = $region77
  $region76: #{encoder_layer_forward.1} parent=0 // pred_region
    _
  $region77: #{encoder_layer_forward.1} parent=0 // pred_fallthru
    _
  // Predicated region
  $region78: #{encoder_layer_forward.1} parent=0 // pred_check
    _
  $region79: #{encoder_layer_forward.1} parent=0 // pred_check_branch
    %72 = sbr.rel (0) target = $region81
  $region80: #{encoder_layer_forward.1} parent=0 // pred_region
    _
  $region81: #{encoder_layer_forward.1} parent=0 // pred_fallthru
    _
  // Predicated region
  $region82: #{encoder_layer_forward.1} parent=0 // pred_check
    _
  $region83: #{encoder_layer_forward.1} parent=0 // pred_check_branch
    %74 = sbr.rel (0) target = $region85
  $region84: #{encoder_layer_forward.1} parent=0 // pred_region
    _
  $region85: #{encoder_layer_forward.1} parent=0 // pred_fallthru
    _
  // Predicated region
  $region86: #{encoder_layer_forward.1} parent=0 // pred_check
    _
  $region87: #{encoder_layer_forward.1} parent=0 // pred_check_branch
    %76 = sbr.rel (0) target = $region89
  $region88: #{encoder_layer_forward.1} parent=0 // pred_region
    _
  $region89: #{encoder_layer_forward.1} parent=0 // pred_fallthru
    _
  // Predicated region
  $region90: #{encoder_layer_forward.1} parent=0 // pred_check
    _
  $region91: #{encoder_layer_forward.1} parent=0 // pred_check_branch
    %78 = sbr.rel (0) target = $region93
  $region92: #{encoder_layer_forward.1} parent=0 // pred_region
    _
  $region93: #{encoder_layer_forward.1} parent=0 // pred_fallthru
    _
  // Predicated region
  $region94: #{encoder_layer_forward.1} parent=0 // pred_check
    _
  $region95: #{encoder_layer_forward.1} parent=0 // pred_check_branch
    %80 = sbr.rel (0) target = $region97
  $region96: #{encoder_layer_forward.1} parent=0 // pred_region
    _
  $region97: #{encoder_layer_forward.1} parent=0 // pred_fallthru
    _
  // Predicated region
  $region98: #{encoder_layer_forward.1} parent=0 // pred_check
    _
  $region99: #{encoder_layer_forward.1} parent=0 // pred_check_branch
    %82 = sbr.rel (0) target = $region101
  $region100: #{encoder_layer_forward.1} parent=0 // pred_region
    _
  $region101: #{encoder_layer_forward.1} parent=0 // pred_fallthru
    _
  // Predicated region
  $region102: #{encoder_layer_forward.1} parent=0 // pred_check
    _
  $region103: #{encoder_layer_forward.1} parent=0 // pred_check_branch
    %84 = sbr.rel (0) target = $region105
  $region104: #{encoder_layer_forward.1} parent=0 // pred_region
    _
  $region105: #{encoder_layer_forward.1} parent=0 // pred_fallthru
    _
  // Predicated region
  $region106: #{encoder_layer_forward.1} parent=0 // pred_check
    _
  $region107: #{encoder_layer_forward.1} parent=0 // pred_check_branch
    %86 = sbr.rel (0) target = $region109
  $region108: #{encoder_layer_forward.1} parent=0 // pred_region
    _
  $region109: #{encoder_layer_forward.1} parent=0 // pred_fallthru
    _
  // Predicated region
  $region110: #{encoder_layer_forward.1} parent=0 // pred_check
    _
  $region111: #{encoder_layer_forward.1} parent=0 // pred_check_branch
    %88 = sbr.rel (0) target = $region113
  $region112: #{encoder_layer_forward.1} parent=0 // pred_region
    _
  $region113: #{encoder_layer_forward.1} parent=0 // pred_fallthru
    _
  %v89 = vld [vmem:[%s0] sm:$0xff]
  %v90 = vld [vmem:[%s0 + $0x8] sm:$0xff]
  %v91 = vld [vmem:[%s0 + $0x10] sm:$0xff]
  %v92 = vld [vmem:[%s0 + $0x18] sm:$0xff]
  %v93 = vld [vmem:[%s1] sm:$0xff]
  %v94 = vld [vmem:[%s1 + $0x8] sm:$0xff]
  %v95 = vld [vmem:[%s1 + $0x10] sm:$0xff]
  %v96 = vld [vmem:[%s1 + $0x18] sm:$0xff]
  %v97 = vld [vmem:[%s2] sm:$0xff]
  %v98 = vld [vmem:[%s2 + $0x8] sm:$0xff]
  %v99 = vld [vmem:[%s2 + $0x10] sm:$0xff]
  %v100 = vld [vmem:[%s2 + $0x18] sm:$0xff]
  %v101 = vadd.f32 %v89, %v97
  %v102 = vadd.f32 %v90, %v98
  %v103 = vadd.f32 %v91, %v99
  %v104 = vadd.f32 %v92, %v100
  %v105 = vadd.f32 %v93, %v97
  %v106 = vadd.f32 %v94, %v98
  %v107 = vadd.f32 %v95, %v99
  %v108 = vadd.f32 %v96, %v100
  %v109 = vld [vmem:[%s6] sm:$0xff]
  %v110 = vld [vmem:[%s6 + $0x8] sm:$0xff]
  %v111 = vld [vmem:[%s6 + $0x10] sm:$0xff]
  %v112 = vld [vmem:[%s6 + $0x18] sm:$0xff]
  %v113 = vld [vmem:[%s7] sm:$0x1]
  %v115 = vperm.slane %v113, 0
  %vm117 = vcmask 261120
  %v119 = vsel %vm117, %v101, 0
  %v122 = vsel %vm117, %v102, 0
  %v125 = vsel %vm117, %v103, 0
  %v128 = vsel %vm117, %v104, 0
  %130 = vmatpush.msra.mxu0 0.0
  %131 = vmatpush.msra.mxu0 0.0
  %132 = vmatpush.msra.mxu0 0.0
  %133 = vmatpush.msra.mxu0 0.0
  %134 = vmatpush.msra.mxu0 0.0
  %135 = vmatpush.msra.mxu0 0.0
  %136 = vmatpush.msra.mxu0 0.0
  %137 = vmatpush.msra.mxu0 0.0
  %138 = vmatpush.msra.mxu0 0.0
  %139 = vmatpush.msra.mxu0 0.0
  %140 = vmatpush.msra.mxu0 0.0
  %141 = vmatpush.msra.mxu0 0.0
  %142 = vmatpush.msra.mxu0 %v112
  %143 = vmatpush.msra.mxu0 %v111
  %144 = vmatpush.msra.mxu0 %v110
  %145 = vmatpush.msra.mxu0 %v109
  %146 = vmatmul.f32.gmra.mxu0 %v119
  %v147 = vpop.f32.mrf.mxu0
  %v148 = vadd.f32 %v115, %v147
  %149 = vmatmul.f32.gmra.mxu0 %v122
  %v150 = vpop.f32.mrf.mxu0
  %v151 = vadd.f32 %v115, %v150
  %152 = vmatmul.f32.gmra.mxu0 %v125
  %v153 = vpop.f32.mrf.mxu0
  %v154 = vadd.f32 %v115, %v153
  %155 = vmatmul.f32.gmra.mxu0 %v128
  %v156 = vpop.f32.mrf.mxu0
  %v157 = vadd.f32 %v115, %v156
  %158 = vdwg.mxu0
  %v159 = vld [vmem:[%s8] sm:$0xff]
  %v160 = vld [vmem:[%s8 + $0x8] sm:$0xff]
  %v161 = vld [vmem:[%s8 + $0x10] sm:$0xff]
  %v162 = vld [vmem:[%s8 + $0x18] sm:$0xff]
  %v163 = vld [vmem:[%s9] sm:$0x1]
  %v165 = vperm.slane %v163, 0
  %v168 = vsel %vm117, %v105, 0
  %v171 = vsel %vm117, %v106, 0
  %v174 = vsel %vm117, %v107, 0
  %v177 = vsel %vm117, %v108, 0
  %179 = vmatpush.msra.mxu0 0.0
  %180 = vmatpush.msra.mxu0 0.0
  %181 = vmatpush.msra.mxu0 0.0
  %182 = vmatpush.msra.mxu0 0.0
  %183 = vmatpush.msra.mxu0 0.0
  %184 = vmatpush.msra.mxu0 0.0
  %185 = vmatpush.msra.mxu0 0.0
  %186 = vmatpush.msra.mxu0 0.0
  %187 = vmatpush.msra.mxu0 0.0
  %188 = vmatpush.msra.mxu0 0.0
  %189 = vmatpush.msra.mxu0 0.0
  %190 = vmatpush.msra.mxu0 0.0
  %191 = vmatpush.msra.mxu0 %v162
  %192 = vmatpush.msra.mxu0 %v161
  %193 = vmatpush.msra.mxu0 %v160
  %194 = vmatpush.msra.mxu0 %v159
  %195 = vmatmul.f32.gmra.mxu0 %v168
  %v196 = vpop.f32.mrf.mxu0
  %v197 = vadd.f32 %v165, %v196
  %198 = vmatmul.f32.gmra.mxu0 %v171
  %v199 = vpop.f32.mrf.mxu0
  %v200 = vadd.f32 %v165, %v199
  %201 = vmatmul.f32.gmra.mxu0 %v174
  %v202 = vpop.f32.mrf.mxu0
  %v203 = vadd.f32 %v165, %v202
  %204 = vmatmul.f32.gmra.mxu0 %v177
  %v205 = vpop.f32.mrf.mxu0
  %v206 = vadd.f32 %v165, %v205
  %207 = vdwg.mxu0
  %v208 = vld [vmem:[%s10] sm:$0xff]
  %v209 = vld [vmem:[%s10 + $0x8] sm:$0xff]
  %v210 = vld [vmem:[%s10 + $0x10] sm:$0xff]
  %v211 = vld [vmem:[%s10 + $0x18] sm:$0xff]
  %v212 = vld [vmem:[%s11] sm:$0x1]
  %v214 = vperm.slane %v212, 0
  %v217 = vsel %vm117, %v93, 0
  %v220 = vsel %vm117, %v94, 0
  %v223 = vsel %vm117, %v95, 0
  %v226 = vsel %vm117, %v96, 0
  %228 = vmatpush.msra.mxu0 0.0
  %229 = vmatpush.msra.mxu0 0.0
  %230 = vmatpush.msra.mxu0 0.0
  %231 = vmatpush.msra.mxu0 0.0
  %232 = vmatpush.msra.mxu0 0.0
  %233 = vmatpush.msra.mxu0 0.0
  %234 = vmatpush.msra.mxu0 0.0
  %235 = vmatpush.msra.mxu0 0.0
  %236 = vmatpush.msra.mxu0 0.0
  %237 = vmatpush.msra.mxu0 0.0
  %238 = vmatpush.msra.mxu0 0.0
  %239 = vmatpush.msra.mxu0 0.0
  %240 = vmatpush.msra.mxu0 %v211
  %241 = vmatpush.msra.mxu0 %v210
  %242 = vmatpush.msra.mxu0 %v209
  %243 = vmatpush.msra.mxu0 %v208
  %244 = vmatmul.f32.gmra.mxu0 %v217
  %v245 = vpop.f32.mrf.mxu0
  %v246 = vadd.f32 %v214, %v245
  %247 = vmatmul.f32.gmra.mxu0 %v220
  %v248 = vpop.f32.mrf.mxu0
  %v249 = vadd.f32 %v214, %v248
  %250 = vmatmul.f32.gmra.mxu0 %v223
  %v251 = vpop.f32.mrf.mxu0
  %v252 = vadd.f32 %v214, %v251
  %253 = vmatmul.f32.gmra.mxu0 %v226
  %v254 = vpop.f32.mrf.mxu0
  %v255 = vadd.f32 %v214, %v254
  %256 = vdwg.mxu0
  %v257 = vld [vmem:[%s4] sm:$0xff]
  %v258 = vld [vmem:[%s4 + $0x8] sm:$0xff]
  %v259 = vld [vmem:[%s4 + $0x10] sm:$0xff]
  %v260 = vld [vmem:[%s4 + $0x18] sm:$0xff]
  %v261 = vld [vmem:[%s5] sm:$0x1]
  %v263 = vperm.slane %v261, 0
  %v265 = vmul.f32 %v148, %v263
  %v266 = vmul.f32 %v151, %v263
  %v267 = vmul.f32 %v154, %v263
  %v268 = vmul.f32 %v157, %v263
  %v270 = vsel %vm117, %v265, 0
  %v273 = vsel %vm117, %v266, 0
  %v276 = vsel %vm117, %v267, 0
  %v279 = vsel %vm117, %v268, 0
  %v282 = vsel %vm117, %v197, 0
  %v285 = vsel %vm117, %v200, 0
  %v288 = vsel %vm117, %v203, 0
  %v291 = vsel %vm117, %v206, 0
  %293 = vmatpush.xpose.msra.mxu0 0.0
  %294 = vmatpush.xpose.msra.mxu0 0.0
  %295 = vmatpush.xpose.msra.mxu0 0.0
  %296 = vmatpush.xpose.msra.mxu0 0.0
  %297 = vmatpush.xpose.msra.mxu0 0.0
  %298 = vmatpush.xpose.msra.mxu0 0.0
  %299 = vmatpush.xpose.msra.mxu0 0.0
  %300 = vmatpush.xpose.msra.mxu0 0.0
  %301 = vmatpush.xpose.msra.mxu0 0.0
  %302 = vmatpush.xpose.msra.mxu0 0.0
  %303 = vmatpush.xpose.msra.mxu0 0.0
  %304 = vmatpush.xpose.msra.mxu0 0.0
  %305 = vmatpush.xpose.msra.mxu0 %v291
  %306 = vmatpush.xpose.msra.mxu0 %v288
  %307 = vmatpush.xpose.msra.mxu0 %v285
  %308 = vmatpush.xpose.msra.mxu0 %v282
  %309 = vmatmul.f32.gmra.mxu0 %v270
  %v310 = vpop.f32.mrf.mxu0
  %v311 = vadd.f32 %v257, %v310
  %312 = vmatmul.f32.gmra.mxu0 %v273
  %v313 = vpop.f32.mrf.mxu0
  %v314 = vadd.f32 %v258, %v313
  %315 = vmatmul.f32.gmra.mxu0 %v276
  %v316 = vpop.f32.mrf.mxu0
  %v317 = vadd.f32 %v259, %v316
  %318 = vmatmul.f32.gmra.mxu0 %v279
  %v319 = vpop.f32.mrf.mxu0
  %v320 = vadd.f32 %v260, %v319
  %321 = vdwg.mxu0
  %v322 = vsel %vm117, %v311, -inf
  %323 = vmax.xlane.f32.xlu0 %v322
  %v324 = vpop.xlane.xlu0 %323
  %v325 = vsel %vm117, %v314, -inf
  %326 = vmax.xlane.f32.xlu0 %v325
  %v327 = vpop.xlane.xlu0 %326
  %v328 = vsel %vm117, %v317, -inf
  %329 = vmax.xlane.f32.xlu0 %v328
  %v330 = vpop.xlane.xlu0 %329
  %v331 = vsel %vm117, %v320, -inf
  %332 = vmax.xlane.f32.xlu0 %v331
  %v333 = vpop.xlane.xlu0 %332
  %v334 = vsub.f32 %v311, %v324
  %v335 = vsub.f32 %v314, %v327
  %v336 = vsub.f32 %v317, %v330
  %v337 = vsub.f32 %v320, %v333
  %v338 = vmul.f32 %v334, 1.442695
  %v339 = vpow.pop %v338
  %v340 = vmul.f32 %v335, 1.442695
  %v341 = vpow.pop %v340
  %v342 = vmul.f32 %v336, 1.442695
  %v343 = vpow.pop %v342
  %v344 = vmul.f32 %v337, 1.442695
  %v345 = vpow.pop %v344
  %v346 = vsel %vm117, %v339, 0.0
  %347 = vadd.xlane.f32.xlu0 %v346
  %v348 = vpop.xlane.xlu0 %347
  %v349 = vsel %vm117, %v341, 0.0
  %350 = vadd.xlane.f32.xlu0 %v349
  %v351 = vpop.xlane.xlu0 %350
  %v352 = vsel %vm117, %v343, 0.0
  %353 = vadd.xlane.f32.xlu0 %v352
  %v354 = vpop.xlane.xlu0 %353
  %v355 = vsel %vm117, %v345, 0.0
  %356 = vadd.xlane.f32.xlu0 %v355
  %v357 = vpop.xlane.xlu0 %356
  %v358 = vrcp.pop %v348
  %v359 = vrcp.pop %v351
  %v360 = vrcp.pop %v354
  %v361 = vrcp.pop %v357
  %v362 = vmul.f32 %v339, %v358
  %v363 = vmul.f32 %v341, %v359
  %v364 = vmul.f32 %v343, %v360
  %v365 = vmul.f32 %v345, %v361
  %v366 = vmul.f32 %v246, %v263
  %v367 = vmul.f32 %v249, %v263
  %v368 = vmul.f32 %v252, %v263
  %v369 = vmul.f32 %v255, %v263
  %s370 = scalar_lea.vmem %s5, 1
  %v371 = vld [vmem:[%s370] sm:$0x1]
  %v373 = vperm.slane %v371, 0
  %v375 = vmul.f32 %v148, %v373
  %v376 = vmul.f32 %v151, %v373
  %v377 = vmul.f32 %v154, %v373
  %v378 = vmul.f32 %v157, %v373
  %v380 = vsel %vm117, %v375, 0
  %v383 = vsel %vm117, %v376, 0
  %v386 = vsel %vm117, %v377, 0
  %v389 = vsel %vm117, %v378, 0
  %391 = vmatpush.xpose.msra.mxu0 0.0
  %392 = vmatpush.xpose.msra.mxu0 0.0
  %393 = vmatpush.xpose.msra.mxu0 0.0
  %394 = vmatpush.xpose.msra.mxu0 0.0
  %395 = vmatpush.xpose.msra.mxu0 0.0
  %396 = vmatpush.xpose.msra.mxu0 0.0
  %397 = vmatpush.xpose.msra.mxu0 0.0
  %398 = vmatpush.xpose.msra.mxu0 0.0
  %399 = vmatpush.xpose.msra.mxu0 0.0
  %400 = vmatpush.xpose.msra.mxu0 0.0
  %401 = vmatpush.xpose.msra.mxu0 0.0
  %402 = vmatpush.xpose.msra.mxu0 0.0
  %403 = vmatpush.xpose.msra.mxu0 %v291
  %404 = vmatpush.xpose.msra.mxu0 %v288
  %405 = vmatpush.xpose.msra.mxu0 %v285
  %406 = vmatpush.xpose.msra.mxu0 %v282
  %407 = vmatmul.f32.gmra.mxu0 %v380
  %v408 = vpop.f32.mrf.mxu0
  %v409 = vadd.f32 %v257, %v408
  %410 = vmatmul.f32.gmra.mxu0 %v383
  %v411 = vpop.f32.mrf.mxu0
  %v412 = vadd.f32 %v258, %v411
  %413 = vmatmul.f32.gmra.mxu0 %v386
  %v414 = vpop.f32.mrf.mxu0
  %v415 = vadd.f32 %v259, %v414
  %416 = vmatmul.f32.gmra.mxu0 %v389
  %v417 = vpop.f32.mrf.mxu0
  %v418 = vadd.f32 %v260, %v417
  %419 = vdwg.mxu0
  %v420 = vsel %vm117, %v409, -inf
  %421 = vmax.xlane.f32.xlu0 %v420
  %v422 = vpop.xlane.xlu0 %421
  %v423 = vsel %vm117, %v412, -inf
  %424 = vmax.xlane.f32.xlu0 %v423
  %v425 = vpop.xlane.xlu0 %424
  %v426 = vsel %vm117, %v415, -inf
  %427 = vmax.xlane.f32.xlu0 %v426
  %v428 = vpop.xlane.xlu0 %427
  %v429 = vsel %vm117, %v418, -inf
  %430 = vmax.xlane.f32.xlu0 %v429
  %v431 = vpop.xlane.xlu0 %430
  %v432 = vsub.f32 %v409, %v422
  %v433 = vsub.f32 %v412, %v425
  %v434 = vsub.f32 %v415, %v428
  %v435 = vsub.f32 %v418, %v431
  %v436 = vmul.f32 %v432, 1.442695
  %v437 = vpow.pop %v436
  %v438 = vmul.f32 %v433, 1.442695
  %v439 = vpow.pop %v438
  %v440 = vmul.f32 %v434, 1.442695
  %v441 = vpow.pop %v440
  %v442 = vmul.f32 %v435, 1.442695
  %v443 = vpow.pop %v442
  %v444 = vsel %vm117, %v437, 0.0
  %445 = vadd.xlane.f32.xlu0 %v444
  %v446 = vpop.xlane.xlu0 %445
  %v447 = vsel %vm117, %v439, 0.0
  %448 = vadd.xlane.f32.xlu0 %v447
  %v449 = vpop.xlane.xlu0 %448
  %v450 = vsel %vm117, %v441, 0.0
  %451 = vadd.xlane.f32.xlu0 %v450
  %v452 = vpop.xlane.xlu0 %451
  %v453 = vsel %vm117, %v443, 0.0
  %454 = vadd.xlane.f32.xlu0 %v453
  %v455 = vpop.xlane.xlu0 %454
  %v456 = vrcp.pop %v446
  %v457 = vrcp.pop %v449
  %v458 = vrcp.pop %v452
  %v459 = vrcp.pop %v455
  %v460 = vmul.f32 %v437, %v456
  %v461 = vmul.f32 %v439, %v457
  %v462 = vmul.f32 %v441, %v458
  %v463 = vmul.f32 %v443, %v459
  %v464 = vmul.f32 %v246, %v373
  %v465 = vmul.f32 %v249, %v373
  %v466 = vmul.f32 %v252, %v373
  %v467 = vmul.f32 %v255, %v373
  %v469 = vsel %vm117, %v460, 0
  %v472 = vsel %vm117, %v461, 0
  %v475 = vsel %vm117, %v462, 0
  %v478 = vsel %vm117, %v463, 0
  %480 = vmatpush.msra.mxu0 0.0
  %481 = vmatpush.msra.mxu0 0.0
  %482 = vmatpush.msra.mxu0 0.0
  %483 = vmatpush.msra.mxu0 0.0
  %484 = vmatpush.msra.mxu0 0.0
  %485 = vmatpush.msra.mxu0 0.0
  %486 = vmatpush.msra.mxu0 0.0
  %487 = vmatpush.msra.mxu0 0.0
  %488 = vmatpush.msra.mxu0 0.0
  %489 = vmatpush.msra.mxu0 0.0
  %490 = vmatpush.msra.mxu0 0.0
  %491 = vmatpush.msra.mxu0 0.0
  %492 = vmatpush.msra.mxu0 %v467
  %493 = vmatpush.msra.mxu0 %v466
  %494 = vmatpush.msra.mxu0 %v465
  %495 = vmatpush.msra.mxu0 %v464
  %496 = vmatmul.f32.gmra.mxu0 %v469
  %v497 = vpop.f32.mrf.mxu0
  %v498 = vadd.f32 0.0, %v497
  %499 = vmatmul.f32.gmra.mxu0 %v472
  %v500 = vpop.f32.mrf.mxu0
  %v501 = vadd.f32 0.0, %v500
  %502 = vmatmul.f32.gmra.mxu0 %v475
  %v503 = vpop.f32.mrf.mxu0
  %v504 = vadd.f32 0.0, %v503
  %505 = vmatmul.f32.gmra.mxu0 %v478
  %v506 = vpop.f32.mrf.mxu0
  %v507 = vadd.f32 0.0, %v506
  %508 = vdwg.mxu0
  %v510 = vsel %vm117, %v362, 0
  %v513 = vsel %vm117, %v363, 0
  %v516 = vsel %vm117, %v364, 0
  %v519 = vsel %vm117, %v365, 0
  %521 = vmatpush.msra.mxu0 0.0
  %522 = vmatpush.msra.mxu0 0.0
  %523 = vmatpush.msra.mxu0 0.0
  %524 = vmatpush.msra.mxu0 0.0
  %525 = vmatpush.msra.mxu0 0.0
  %526 = vmatpush.msra.mxu0 0.0
  %527 = vmatpush.msra.mxu0 0.0
  %528 = vmatpush.msra.mxu0 0.0
  %529 = vmatpush.msra.mxu0 0.0
  %530 = vmatpush.msra.mxu0 0.0
  %531 = vmatpush.msra.mxu0 0.0
  %532 = vmatpush.msra.mxu0 0.0
  %533 = vmatpush.msra.mxu0 %v369
  %534 = vmatpush.msra.mxu0 %v368
  %535 = vmatpush.msra.mxu0 %v367
  %536 = vmatpush.msra.mxu0 %v366
  %537 = vmatmul.f32.gmra.mxu0 %v510
  %v538 = vpop.f32.mrf.mxu0
  %v539 = vadd.f32 %v498, %v538
  %540 = vmatmul.f32.gmra.mxu0 %v513
  %v541 = vpop.f32.mrf.mxu0
  %v542 = vadd.f32 %v501, %v541
  %543 = vmatmul.f32.gmra.mxu0 %v516
  %v544 = vpop.f32.mrf.mxu0
  %v545 = vadd.f32 %v504, %v544
  %546 = vmatmul.f32.gmra.mxu0 %v519
  %v547 = vpop.f32.mrf.mxu0
  %v548 = vadd.f32 %v507, %v547
  %549 = vdwg.mxu0
  %s550 = scalar_lea.vmem %s5, 2
  %v551 = vld [vmem:[%s550] sm:$0x1]
  %v553 = vperm.slane %v551, 0
  %v555 = vmul.f32 %v148, %v553
  %v556 = vmul.f32 %v151, %v553
  %v557 = vmul.f32 %v154, %v553
  %v558 = vmul.f32 %v157, %v553
  %v560 = vsel %vm117, %v555, 0
  %v563 = vsel %vm117, %v556, 0
  %v566 = vsel %vm117, %v557, 0
  %v569 = vsel %vm117, %v558, 0
  %571 = vmatpush.xpose.msra.mxu0 0.0
  %572 = vmatpush.xpose.msra.mxu0 0.0
  %573 = vmatpush.xpose.msra.mxu0 0.0
  %574 = vmatpush.xpose.msra.mxu0 0.0
  %575 = vmatpush.xpose.msra.mxu0 0.0
  %576 = vmatpush.xpose.msra.mxu0 0.0
  %577 = vmatpush.xpose.msra.mxu0 0.0
  %578 = vmatpush.xpose.msra.mxu0 0.0
  %579 = vmatpush.xpose.msra.mxu0 0.0
  %580 = vmatpush.xpose.msra.mxu0 0.0
  %581 = vmatpush.xpose.msra.mxu0 0.0
  %582 = vmatpush.xpose.msra.mxu0 0.0
  %583 = vmatpush.xpose.msra.mxu0 %v291
  %584 = vmatpush.xpose.msra.mxu0 %v288
  %585 = vmatpush.xpose.msra.mxu0 %v285
  %586 = vmatpush.xpose.msra.mxu0 %v282
  %587 = vmatmul.f32.gmra.mxu0 %v560
  %v588 = vpop.f32.mrf.mxu0
  %v589 = vadd.f32 %v257, %v588
  %590 = vmatmul.f32.gmra.mxu0 %v563
  %v591 = vpop.f32.mrf.mxu0
  %v592 = vadd.f32 %v258, %v591
  %593 = vmatmul.f32.gmra.mxu0 %v566
  %v594 = vpop.f32.mrf.mxu0
  %v595 = vadd.f32 %v259, %v594
  %596 = vmatmul.f32.gmra.mxu0 %v569
  %v597 = vpop.f32.mrf.mxu0
  %v598 = vadd.f32 %v260, %v597
  %599 = vdwg.mxu0
  %v600 = vsel %vm117, %v589, -inf
  %601 = vmax.xlane.f32.xlu0 %v600
  %v602 = vpop.xlane.xlu0 %601
  %v603 = vsel %vm117, %v592, -inf
  %604 = vmax.xlane.f32.xlu0 %v603
  %v605 = vpop.xlane.xlu0 %604
  %v606 = vsel %vm117, %v595, -inf
  %607 = vmax.xlane.f32.xlu0 %v606
  %v608 = vpop.xlane.xlu0 %607
  %v609 = vsel %vm117, %v598, -inf
  %610 = vmax.xlane.f32.xlu0 %v609
  %v611 = vpop.xlane.xlu0 %610
  %v612 = vsub.f32 %v589, %v602
  %v613 = vsub.f32 %v592, %v605
  %v614 = vsub.f32 %v595, %v608
  %v615 = vsub.f32 %v598, %v611
  %v616 = vmul.f32 %v612, 1.442695
  %v617 = vpow.pop %v616
  %v618 = vmul.f32 %v613, 1.442695
  %v619 = vpow.pop %v618
  %v620 = vmul.f32 %v614, 1.442695
  %v621 = vpow.pop %v620
  %v622 = vmul.f32 %v615, 1.442695
  %v623 = vpow.pop %v622
  %v624 = vsel %vm117, %v617, 0.0
  %625 = vadd.xlane.f32.xlu0 %v624
  %v626 = vpop.xlane.xlu0 %625
  %v627 = vsel %vm117, %v619, 0.0
  %628 = vadd.xlane.f32.xlu0 %v627
  %v629 = vpop.xlane.xlu0 %628
  %v630 = vsel %vm117, %v621, 0.0
  %631 = vadd.xlane.f32.xlu0 %v630
  %v632 = vpop.xlane.xlu0 %631
  %v633 = vsel %vm117, %v623, 0.0
  %634 = vadd.xlane.f32.xlu0 %v633
  %v635 = vpop.xlane.xlu0 %634
  %v636 = vrcp.pop %v626
  %v637 = vrcp.pop %v629
  %v638 = vrcp.pop %v632
  %v639 = vrcp.pop %v635
  %v640 = vmul.f32 %v617, %v636
  %v641 = vmul.f32 %v619, %v637
  %v642 = vmul.f32 %v621, %v638
  %v643 = vmul.f32 %v623, %v639
  %v644 = vmul.f32 %v246, %v553
  %v645 = vmul.f32 %v249, %v553
  %v646 = vmul.f32 %v252, %v553
  %v647 = vmul.f32 %v255, %v553
  %v649 = vsel %vm117, %v640, 0
  %v652 = vsel %vm117, %v641, 0
  %v655 = vsel %vm117, %v642, 0
  %v658 = vsel %vm117, %v643, 0
  %660 = vmatpush.msra.mxu0 0.0
  %661 = vmatpush.msra.mxu0 0.0
  %662 = vmatpush.msra.mxu0 0.0
  %663 = vmatpush.msra.mxu0 0.0
  %664 = vmatpush.msra.mxu0 0.0
  %665 = vmatpush.msra.mxu0 0.0
  %666 = vmatpush.msra.mxu0 0.0
  %667 = vmatpush.msra.mxu0 0.0
  %668 = vmatpush.msra.mxu0 0.0
  %669 = vmatpush.msra.mxu0 0.0
  %670 = vmatpush.msra.mxu0 0.0
  %671 = vmatpush.msra.mxu0 0.0
  %672 = vmatpush.msra.mxu0 %v647
  %673 = vmatpush.msra.mxu0 %v646
  %674 = vmatpush.msra.mxu0 %v645
  %675 = vmatpush.msra.mxu0 %v644
  %676 = vmatmul.f32.gmra.mxu0 %v649
  %v677 = vpop.f32.mrf.mxu0
  %v678 = vadd.f32 0.0, %v677
  %679 = vmatmul.f32.gmra.mxu0 %v652
  %v680 = vpop.f32.mrf.mxu0
  %v681 = vadd.f32 0.0, %v680
  %682 = vmatmul.f32.gmra.mxu0 %v655
  %v683 = vpop.f32.mrf.mxu0
  %v684 = vadd.f32 0.0, %v683
  %685 = vmatmul.f32.gmra.mxu0 %v658
  %v686 = vpop.f32.mrf.mxu0
  %v687 = vadd.f32 0.0, %v686
  %688 = vdwg.mxu0
  %v689 = vadd.f32 %v539, %v678
  %v690 = vadd.f32 %v542, %v681
  %v691 = vadd.f32 %v545, %v684
  %v692 = vadd.f32 %v548, %v687
  %s693 = scalar_lea.vmem %s5, 3
  %v694 = vld [vmem:[%s693] sm:$0x1]
  %v696 = vperm.slane %v694, 0
  %v698 = vmul.f32 %v148, %v696
  %v699 = vmul.f32 %v151, %v696
  %v700 = vmul.f32 %v154, %v696
  %v701 = vmul.f32 %v157, %v696
  %v703 = vsel %vm117, %v698, 0
  %v706 = vsel %vm117, %v699, 0
  %v709 = vsel %vm117, %v700, 0
  %v712 = vsel %vm117, %v701, 0
  %714 = vmatpush.xpose.msra.mxu0 0.0
  %715 = vmatpush.xpose.msra.mxu0 0.0
  %716 = vmatpush.xpose.msra.mxu0 0.0
  %717 = vmatpush.xpose.msra.mxu0 0.0
  %718 = vmatpush.xpose.msra.mxu0 0.0
  %719 = vmatpush.xpose.msra.mxu0 0.0
  %720 = vmatpush.xpose.msra.mxu0 0.0
  %721 = vmatpush.xpose.msra.mxu0 0.0
  %722 = vmatpush.xpose.msra.mxu0 0.0
  %723 = vmatpush.xpose.msra.mxu0 0.0
  %724 = vmatpush.xpose.msra.mxu0 0.0
  %725 = vmatpush.xpose.msra.mxu0 0.0
  %726 = vmatpush.xpose.msra.mxu0 %v291
  %727 = vmatpush.xpose.msra.mxu0 %v288
  %728 = vmatpush.xpose.msra.mxu0 %v285
  %729 = vmatpush.xpose.msra.mxu0 %v282
  %730 = vmatmul.f32.gmra.mxu0 %v703
  %v731 = vpop.f32.mrf.mxu0
  %v732 = vadd.f32 %v257, %v731
  %733 = vmatmul.f32.gmra.mxu0 %v706
  %v734 = vpop.f32.mrf.mxu0
  %v735 = vadd.f32 %v258, %v734
  %736 = vmatmul.f32.gmra.mxu0 %v709
  %v737 = vpop.f32.mrf.mxu0
  %v738 = vadd.f32 %v259, %v737
  %739 = vmatmul.f32.gmra.mxu0 %v712
  %v740 = vpop.f32.mrf.mxu0
  %v741 = vadd.f32 %v260, %v740
  %742 = vdwg.mxu0
  %v743 = vsel %vm117, %v732, -inf
  %744 = vmax.xlane.f32.xlu0 %v743
  %v745 = vpop.xlane.xlu0 %744
  %v746 = vsel %vm117, %v735, -inf
  %747 = vmax.xlane.f32.xlu0 %v746
  %v748 = vpop.xlane.xlu0 %747
  %v749 = vsel %vm117, %v738, -inf
  %750 = vmax.xlane.f32.xlu0 %v749
  %v751 = vpop.xlane.xlu0 %750
  %v752 = vsel %vm117, %v741, -inf
  %753 = vmax.xlane.f32.xlu0 %v752
  %v754 = vpop.xlane.xlu0 %753
  %v755 = vsub.f32 %v732, %v745
  %v756 = vsub.f32 %v735, %v748
  %v757 = vsub.f32 %v738, %v751
  %v758 = vsub.f32 %v741, %v754
  %v759 = vmul.f32 %v755, 1.442695
  %v760 = vpow.pop %v759
  %v761 = vmul.f32 %v756, 1.442695
  %v762 = vpow.pop %v761
  %v763 = vmul.f32 %v757, 1.442695
  %v764 = vpow.pop %v763
  %v765 = vmul.f32 %v758, 1.442695
  %v766 = vpow.pop %v765
  %v767 = vsel %vm117, %v760, 0.0
  %768 = vadd.xlane.f32.xlu0 %v767
  %v769 = vpop.xlane.xlu0 %768
  %v770 = vsel %vm117, %v762, 0.0
  %771 = vadd.xlane.f32.xlu0 %v770
  %v772 = vpop.xlane.xlu0 %771
  %v773 = vsel %vm117, %v764, 0.0
  %774 = vadd.xlane.f32.xlu0 %v773
  %v775 = vpop.xlane.xlu0 %774
  %v776 = vsel %vm117, %v766, 0.0
  %777 = vadd.xlane.f32.xlu0 %v776
  %v778 = vpop.xlane.xlu0 %777
  %v779 = vrcp.pop %v769
  %v780 = vrcp.pop %v772
  %v781 = vrcp.pop %v775
  %v782 = vrcp.pop %v778
  %v783 = vmul.f32 %v760, %v779
  %v784 = vmul.f32 %v762, %v780
  %v785 = vmul.f32 %v764, %v781
  %v786 = vmul.f32 %v766, %v782
  %v787 = vmul.f32 %v246, %v696
  %v788 = vmul.f32 %v249, %v696
  %v789 = vmul.f32 %v252, %v696
  %v790 = vmul.f32 %v255, %v696
  %v792 = vsel %vm117, %v783, 0
  %v795 = vsel %vm117, %v784, 0
  %v798 = vsel %vm117, %v785, 0
  %v801 = vsel %vm117, %v786, 0
  %803 = vmatpush.msra.mxu0 0.0
  %804 = vmatpush.msra.mxu0 0.0
  %805 = vmatpush.msra.mxu0 0.0
  %806 = vmatpush.msra.mxu0 0.0
  %807 = vmatpush.msra.mxu0 0.0
  %808 = vmatpush.msra.mxu0 0.0
  %809 = vmatpush.msra.mxu0 0.0
  %810 = vmatpush.msra.mxu0 0.0
  %811 = vmatpush.msra.mxu0 0.0
  %812 = vmatpush.msra.mxu0 0.0
  %813 = vmatpush.msra.mxu0 0.0
  %814 = vmatpush.msra.mxu0 0.0
  %815 = vmatpush.msra.mxu0 %v790
  %816 = vmatpush.msra.mxu0 %v789
  %817 = vmatpush.msra.mxu0 %v788
  %818 = vmatpush.msra.mxu0 %v787
  %819 = vmatmul.f32.gmra.mxu0 %v792
  %v820 = vpop.f32.mrf.mxu0
  %v821 = vadd.f32 0.0, %v820
  %822 = vmatmul.f32.gmra.mxu0 %v795
  %v823 = vpop.f32.mrf.mxu0
  %v824 = vadd.f32 0.0, %v823
  %825 = vmatmul.f32.gmra.mxu0 %v798
  %v826 = vpop.f32.mrf.mxu0
  %v827 = vadd.f32 0.0, %v826
  %828 = vmatmul.f32.gmra.mxu0 %v801
  %v829 = vpop.f32.mrf.mxu0
  %v830 = vadd.f32 0.0, %v829
  %831 = vdwg.mxu0
  %v832 = vadd.f32 %v689, %v821
  %v833 = vadd.f32 %v690, %v824
  %v834 = vadd.f32 %v691, %v827
  %v835 = vadd.f32 %v692, %v830
  %v836 = vld [vmem:[%s12] sm:$0xff]
  %v837 = vld [vmem:[%s12 + $0x8] sm:$0xff]
  %v838 = vld [vmem:[%s12 + $0x10] sm:$0xff]
  %v839 = vld [vmem:[%s12 + $0x18] sm:$0xff]
  %v840 = vld [vmem:[%s13] sm:$0x1]
  %v842 = vperm.slane %v840, 0
  %v845 = vsel %vm117, %v832, 0
  %v848 = vsel %vm117, %v833, 0
  %v851 = vsel %vm117, %v834, 0
  %v854 = vsel %vm117, %v835, 0
  %856 = vmatpush.msra.mxu0 0.0
  %857 = vmatpush.msra.mxu0 0.0
  %858 = vmatpush.msra.mxu0 0.0
  %859 = vmatpush.msra.mxu0 0.0
  %860 = vmatpush.msra.mxu0 0.0
  %861 = vmatpush.msra.mxu0 0.0
  %862 = vmatpush.msra.mxu0 0.0
  %863 = vmatpush.msra.mxu0 0.0
  %864 = vmatpush.msra.mxu0 0.0
  %865 = vmatpush.msra.mxu0 0.0
  %866 = vmatpush.msra.mxu0 0.0
  %867 = vmatpush.msra.mxu0 0.0
  %868 = vmatpush.msra.mxu0 %v839
  %869 = vmatpush.msra.mxu0 %v838
  %870 = vmatpush.msra.mxu0 %v837
  %871 = vmatpush.msra.mxu0 %v836
  %872 = vmatmul.f32.gmra.mxu0 %v845
  %v873 = vpop.f32.mrf.mxu0
  %v874 = vadd.f32 %v842, %v873
  %875 = vmatmul.f32.gmra.mxu0 %v848
  %v876 = vpop.f32.mrf.mxu0
  %v877 = vadd.f32 %v842, %v876
  %878 = vmatmul.f32.gmra.mxu0 %v851
  %v879 = vpop.f32.mrf.mxu0
  %v880 = vadd.f32 %v842, %v879
  %881 = vmatmul.f32.gmra.mxu0 %v854
  %v882 = vpop.f32.mrf.mxu0
  %v883 = vadd.f32 %v842, %v882
  %884 = vdwg.mxu0
  %v885 = vld [vmem:[%s15] sm:$0xff]
  %v886 = vld [vmem:[%s15 + $0x8] sm:$0xff]
  %v887 = vld [vmem:[%s15 + $0x10] sm:$0xff]
  %v888 = vld [vmem:[%s15 + $0x18] sm:$0xff]
  %v889 = vld [vmem:[%s16] sm:$0x1]
  %v891 = vperm.slane %v889, 0
  %v894 = vsel %vm117, %v89, 0
  %v897 = vsel %vm117, %v90, 0
  %v900 = vsel %vm117, %v91, 0
  %v903 = vsel %vm117, %v92, 0
  %905 = vmatpush.msra.mxu0 0.0
  %906 = vmatpush.msra.mxu0 0.0
  %907 = vmatpush.msra.mxu0 0.0
  %908 = vmatpush.msra.mxu0 0.0
  %909 = vmatpush.msra.mxu0 0.0
  %910 = vmatpush.msra.mxu0 0.0
  %911 = vmatpush.msra.mxu0 0.0
  %912 = vmatpush.msra.mxu0 0.0
  %913 = vmatpush.msra.mxu0 0.0
  %914 = vmatpush.msra.mxu0 0.0
  %915 = vmatpush.msra.mxu0 0.0
  %916 = vmatpush.msra.mxu0 0.0
  %917 = vmatpush.msra.mxu0 %v888
  %918 = vmatpush.msra.mxu0 %v887
  %919 = vmatpush.msra.mxu0 %v886
  %920 = vmatpush.msra.mxu0 %v885
  %921 = vmatmul.f32.gmra.mxu0 %v894
  %v922 = vpop.f32.mrf.mxu0
  %v923 = vadd.f32 %v891, %v922
  %924 = vmatmul.f32.gmra.mxu0 %v897
  %v925 = vpop.f32.mrf.mxu0
  %v926 = vadd.f32 %v891, %v925
  %927 = vmatmul.f32.gmra.mxu0 %v900
  %v928 = vpop.f32.mrf.mxu0
  %v929 = vadd.f32 %v891, %v928
  %930 = vmatmul.f32.gmra.mxu0 %v903
  %v931 = vpop.f32.mrf.mxu0
  %v932 = vadd.f32 %v891, %v931
  %933 = vdwg.mxu0
  %v934 = vld [vmem:[%s3] sm:$0xff]
  %v935 = vld [vmem:[%s3 + $0x8] sm:$0xff]
  %v936 = vld [vmem:[%s3 + $0x10] sm:$0xff]
  %v937 = vld [vmem:[%s3 + $0x18] sm:$0xff]
  %v938 = vld [vmem:[%s3 + $0x20] sm:$0xff]
  %v939 = vld [vmem:[%s3 + $0x28] sm:$0xff]
  %v940 = vld [vmem:[%s3 + $0x30] sm:$0xff]
  %v941 = vld [vmem:[%s3 + $0x38] sm:$0xff]
  %v942 = vld [vmem:[%s3 + $0x40] sm:$0xff]
  %v943 = vld [vmem:[%s3 + $0x48] sm:$0xff]
  %v944 = vld [vmem:[%s3 + $0x50] sm:$0xff]
  %v945 = vld [vmem:[%s3 + $0x58] sm:$0xff]
  %v946 = vld [vmem:[%s3 + $0x60] sm:$0xff]
  %v947 = vld [vmem:[%s3 + $0x68] sm:$0xff]
  %v948 = vld [vmem:[%s3 + $0x70] sm:$0xff]
  %v949 = vld [vmem:[%s3 + $0x78] sm:$0xff]
  %v950 = vld [vmem:[%s3 + $0x80] sm:$0xff]
  %v951 = vld [vmem:[%s3 + $0x88] sm:$0xff]
  %v952 = vld [vmem:[%s3 + $0x90] sm:$0xff]
  %v953 = vld [vmem:[%s3 + $0x98] sm:$0xff]
  %v954 = vld [vmem:[%s3 + $0xa0] sm:$0xff]
  %v955 = vld [vmem:[%s3 + $0xa8] sm:$0xff]
  %v956 = vld [vmem:[%s3 + $0xb0] sm:$0xff]
  %v957 = vld [vmem:[%s3 + $0xb8] sm:$0xff]
  %v958 = vld [vmem:[%s3 + $0xc0] sm:$0xff]
  %v959 = vld [vmem:[%s3 + $0xc8] sm:$0xff]
  %v960 = vld [vmem:[%s3 + $0xd0] sm:$0xff]
  %v961 = vld [vmem:[%s3 + $0xd8] sm:$0xff]
  %v962 = vld [vmem:[%s3 + $0xe0] sm:$0xff]
  %v963 = vld [vmem:[%s3 + $0xe8] sm:$0xff]
  %v964 = vld [vmem:[%s3 + $0xf0] sm:$0xff]
  %v965 = vld [vmem:[%s3 + $0xf8] sm:$0xff]
  %v966 = vld [vmem:[%s3 + $0x100] sm:$0xff]
  %v967 = vld [vmem:[%s3 + $0x108] sm:$0xff]
  %v968 = vld [vmem:[%s3 + $0x110] sm:$0xff]
  %v969 = vld [vmem:[%s3 + $0x118] sm:$0xff]
  %v970 = vld [vmem:[%s14] sm:$0xff]
  %v971 = vld [vmem:[%s14 + $0x8] sm:$0xff]
  %v972 = vld [vmem:[%s14 + $0x10] sm:$0xff]
  %v973 = vld [vmem:[%s14 + $0x18] sm:$0xff]
  %v975 = vsel %vm117, %v934, 0
  %v978 = vsel %vm117, %v935, 0
  %v981 = vsel %vm117, %v936, 0
  %v984 = vsel %vm117, %v937, 0
  %v987 = vsel %vm117, %v938, 0
  %v990 = vsel %vm117, %v939, 0
  %v993 = vsel %vm117, %v940, 0
  %v996 = vsel %vm117, %v941, 0
  %v999 = vsel %vm117, %v942, 0
  %v1002 = vsel %vm117, %v943, 0
  %v1005 = vsel %vm117, %v944, 0
  %v1008 = vsel %vm117, %v945, 0
  %v1011 = vsel %vm117, %v946, 0
  %v1014 = vsel %vm117, %v947, 0
  %v1017 = vsel %vm117, %v948, 0
  %v1020 = vsel %vm117, %v949, 0
  %v1023 = vsel %vm117, %v950, 0
  %v1026 = vsel %vm117, %v951, 0
  %v1029 = vsel %vm117, %v952, 0
  %v1032 = vsel %vm117, %v953, 0
  %v1035 = vsel %vm117, %v954, 0
  %v1038 = vsel %vm117, %v955, 0
  %v1041 = vsel %vm117, %v956, 0
  %v1044 = vsel %vm117, %v957, 0
  %v1047 = vsel %vm117, %v958, 0
  %v1050 = vsel %vm117, %v959, 0
  %v1053 = vsel %vm117, %v960, 0
  %v1056 = vsel %vm117, %v961, 0
  %v1059 = vsel %vm117, %v962, 0
  %v1062 = vsel %vm117, %v963, 0
  %v1065 = vsel %vm117, %v964, 0
  %v1068 = vsel %vm117, %v965, 0
  %v1071 = vsel %vm117, %v966, 0
  %v1074 = vsel %vm117, %v967, 0
  %v1077 = vsel %vm117, %v968, 0
  %v1080 = vsel %vm117, %v969, 0
  %1082 = vmatpush.msra.mxu0 0.0
  %1083 = vmatpush.msra.mxu0 0.0
  %1084 = vmatpush.msra.mxu0 0.0
  %1085 = vmatpush.msra.mxu0 0.0
  %1086 = vmatpush.msra.mxu0 0.0
  %1087 = vmatpush.msra.mxu0 0.0
  %1088 = vmatpush.msra.mxu0 0.0
  %1089 = vmatpush.msra.mxu0 0.0
  %1090 = vmatpush.msra.mxu0 0.0
  %1091 = vmatpush.msra.mxu0 0.0
  %1092 = vmatpush.msra.mxu0 0.0
  %1093 = vmatpush.msra.mxu0 0.0
  %1094 = vmatpush.msra.mxu0 %v973
  %1095 = vmatpush.msra.mxu0 %v972
  %1096 = vmatpush.msra.mxu0 %v971
  %1097 = vmatpush.msra.mxu0 %v970
  %1098 = vmatmul.f32.gmra.mxu0 %v975
  %v1099 = vpop.f32.mrf.mxu0
  %v1100 = vadd.f32 0.0, %v1099
  %1101 = vmatmul.f32.gmra.mxu0 %v978
  %v1102 = vpop.f32.mrf.mxu0
  %v1103 = vadd.f32 0.0, %v1102
  %1104 = vmatmul.f32.gmra.mxu0 %v981
  %v1105 = vpop.f32.mrf.mxu0
  %v1106 = vadd.f32 0.0, %v1105
  %1107 = vmatmul.f32.gmra.mxu0 %v984
  %v1108 = vpop.f32.mrf.mxu0
  %v1109 = vadd.f32 0.0, %v1108
  %1110 = vmatmul.f32.gmra.mxu0 %v987
  %v1111 = vpop.f32.mrf.mxu0
  %v1112 = vadd.f32 0.0, %v1111
  %1113 = vmatmul.f32.gmra.mxu0 %v990
  %v1114 = vpop.f32.mrf.mxu0
  %v1115 = vadd.f32 0.0, %v1114
  %1116 = vmatmul.f32.gmra.mxu0 %v993
  %v1117 = vpop.f32.mrf.mxu0
  %v1118 = vadd.f32 0.0, %v1117
  %1119 = vmatmul.f32.gmra.mxu0 %v996
  %v1120 = vpop.f32.mrf.mxu0
  %v1121 = vadd.f32 0.0, %v1120
  %1122 = vmatmul.f32.gmra.mxu0 %v999
  %v1123 = vpop.f32.mrf.mxu0
  %v1124 = vadd.f32 0.0, %v1123
  %1125 = vmatmul.f32.gmra.mxu0 %v1002
  %v1126 = vpop.f32.mrf.mxu0
  %v1127 = vadd.f32 0.0, %v1126
  %1128 = vmatmul.f32.gmra.mxu0 %v1005
  %v1129 = vpop.f32.mrf.mxu0
  %v1130 = vadd.f32 0.0, %v1129
  %1131 = vmatmul.f32.gmra.mxu0 %v1008
  %v1132 = vpop.f32.mrf.mxu0
  %v1133 = vadd.f32 0.0, %v1132
  %1134 = vmatmul.f32.gmra.mxu0 %v1011
  %v1135 = vpop.f32.mrf.mxu0
  %v1136 = vadd.f32 0.0, %v1135
  %1137 = vmatmul.f32.gmra.mxu0 %v1014
  %v1138 = vpop.f32.mrf.mxu0
  %v1139 = vadd.f32 0.0, %v1138
  %1140 = vmatmul.f32.gmra.mxu0 %v1017
  %v1141 = vpop.f32.mrf.mxu0
  %v1142 = vadd.f32 0.0, %v1141
  %1143 = vmatmul.f32.gmra.mxu0 %v1020
  %v1144 = vpop.f32.mrf.mxu0
  %v1145 = vadd.f32 0.0, %v1144
  %1146 = vmatmul.f32.gmra.mxu0 %v1023
  %v1147 = vpop.f32.mrf.mxu0
  %v1148 = vadd.f32 0.0, %v1147
  %1149 = vmatmul.f32.gmra.mxu0 %v1026
  %v1150 = vpop.f32.mrf.mxu0
  %v1151 = vadd.f32 0.0, %v1150
  %1152 = vmatmul.f32.gmra.mxu0 %v1029
  %v1153 = vpop.f32.mrf.mxu0
  %v1154 = vadd.f32 0.0, %v1153
  %1155 = vmatmul.f32.gmra.mxu0 %v1032
  %v1156 = vpop.f32.mrf.mxu0
  %v1157 = vadd.f32 0.0, %v1156
  %1158 = vmatmul.f32.gmra.mxu0 %v1035
  %v1159 = vpop.f32.mrf.mxu0
  %v1160 = vadd.f32 0.0, %v1159
  %1161 = vmatmul.f32.gmra.mxu0 %v1038
  %v1162 = vpop.f32.mrf.mxu0
  %v1163 = vadd.f32 0.0, %v1162
  %1164 = vmatmul.f32.gmra.mxu0 %v1041
  %v1165 = vpop.f32.mrf.mxu0
  %v1166 = vadd.f32 0.0, %v1165
  %1167 = vmatmul.f32.gmra.mxu0 %v1044
  %v1168 = vpop.f32.mrf.mxu0
  %v1169 = vadd.f32 0.0, %v1168
  %1170 = vmatmul.f32.gmra.mxu0 %v1047
  %v1171 = vpop.f32.mrf.mxu0
  %v1172 = vadd.f32 0.0, %v1171
  %1173 = vmatmul.f32.gmra.mxu0 %v1050
  %v1174 = vpop.f32.mrf.mxu0
  %v1175 = vadd.f32 0.0, %v1174
  %1176 = vmatmul.f32.gmra.mxu0 %v1053
  %v1177 = vpop.f32.mrf.mxu0
  %v1178 = vadd.f32 0.0, %v1177
  %1179 = vmatmul.f32.gmra.mxu0 %v1056
  %v1180 = vpop.f32.mrf.mxu0
  %v1181 = vadd.f32 0.0, %v1180
  %1182 = vmatmul.f32.gmra.mxu0 %v1059
  %v1183 = vpop.f32.mrf.mxu0
  %v1184 = vadd.f32 0.0, %v1183
  %1185 = vmatmul.f32.gmra.mxu0 %v1062
  %v1186 = vpop.f32.mrf.mxu0
  %v1187 = vadd.f32 0.0, %v1186
  %1188 = vmatmul.f32.gmra.mxu0 %v1065
  %v1189 = vpop.f32.mrf.mxu0
  %v1190 = vadd.f32 0.0, %v1189
  %1191 = vmatmul.f32.gmra.mxu0 %v1068
  %v1192 = vpop.f32.mrf.mxu0
  %v1193 = vadd.f32 0.0, %v1192
  %1194 = vmatmul.f32.gmra.mxu0 %v1071
  %v1195 = vpop.f32.mrf.mxu0
  %v1196 = vadd.f32 0.0, %v1195
  %1197 = vmatmul.f32.gmra.mxu0 %v1074
  %v1198 = vpop.f32.mrf.mxu0
  %v1199 = vadd.f32 0.0, %v1198
  %1200 = vmatmul.f32.gmra.mxu0 %v1077
  %v1201 = vpop.f32.mrf.mxu0
  %v1202 = vadd.f32 0.0, %v1201
  %1203 = vmatmul.f32.gmra.mxu0 %v1080
  %v1204 = vpop.f32.mrf.mxu0
  %v1205 = vadd.f32 0.0, %v1204
  %1206 = vdwg.mxu0
  %v1207 = vadd.f32 %v1100, %v923
  %v1208 = vadd.f32 %v1103, %v926
  %v1209 = vadd.f32 %v1106, %v929
  %v1210 = vadd.f32 %v1109, %v932
  %vm1211 = vcmp.ge.f32.partialorder %v1207, 0.0
  %vm1212 = vcmp.ge.f32.partialorder %v1208, 0.0
  %vm1213 = vcmp.ge.f32.partialorder %v1209, 0.0
  %vm1214 = vcmp.ge.f32.partialorder %v1210, 0.0
  %v1215 = vmul.f32 %v1207, 0.2
  %v1216 = vmul.f32 %v1208, 0.2
  %v1217 = vmul.f32 %v1209, 0.2
  %v1218 = vmul.f32 %v1210, 0.2
  %v1219 = vsel %vm1211, %v1207, %v1215
  %v1220 = vsel %vm1212, %v1208, %v1216
  %v1221 = vsel %vm1213, %v1209, %v1217
  %v1222 = vsel %vm1214, %v1210, %v1218
  %v1223 = vadd.f32 %v1112, %v923
  %v1224 = vadd.f32 %v1115, %v926
  %v1225 = vadd.f32 %v1118, %v929
  %v1226 = vadd.f32 %v1121, %v932
  %vm1227 = vcmp.ge.f32.partialorder %v1223, 0.0
  %vm1228 = vcmp.ge.f32.partialorder %v1224, 0.0
  %vm1229 = vcmp.ge.f32.partialorder %v1225, 0.0
  %vm1230 = vcmp.ge.f32.partialorder %v1226, 0.0
  %v1231 = vmul.f32 %v1223, 0.2
  %v1232 = vmul.f32 %v1224, 0.2
  %v1233 = vmul.f32 %v1225, 0.2
  %v1234 = vmul.f32 %v1226, 0.2
  %v1235 = vsel %vm1227, %v1223, %v1231
  %v1236 = vsel %vm1228, %v1224, %v1232
  %v1237 = vsel %vm1229, %v1225, %v1233
  %v1238 = vsel %vm1230, %v1226, %v1234
  %v1239 = vmax.f32 %v1219, %v1235
  %v1240 = vmax.f32 %v1220, %v1236
  %v1241 = vmax.f32 %v1221, %v1237
  %v1242 = vmax.f32 %v1222, %v1238
  %v1243 = vadd.f32 %v1124, %v923
  %v1244 = vadd.f32 %v1127, %v926
  %v1245 = vadd.f32 %v1130, %v929
  %v1246 = vadd.f32 %v1133, %v932
  %vm1247 = vcmp.ge.f32.partialorder %v1243, 0.0
  %vm1248 = vcmp.ge.f32.partialorder %v1244, 0.0
  %vm1249 = vcmp.ge.f32.partialorder %v1245, 0.0
  %vm1250 = vcmp.ge.f32.partialorder %v1246, 0.0
  %v1251 = vmul.f32 %v1243, 0.2
  %v1252 = vmul.f32 %v1244, 0.2
  %v1253 = vmul.f32 %v1245, 0.2
  %v1254 = vmul.f32 %v1246, 0.2
  %v1255 = vsel %vm1247, %v1243, %v1251
  %v1256 = vsel %vm1248, %v1244, %v1252
  %v1257 = vsel %vm1249, %v1245, %v1253
  %v1258 = vsel %vm1250, %v1246, %v1254
  %v1259 = vmax.f32 %v1239, %v1255
  %v1260 = vmax.f32 %v1240, %v1256
  %v1261 = vmax.f32 %v1241, %v1257
  %v1262 = vmax.f32 %v1242, %v1258
  %v1263 = vadd.f32 %v1136, %v923
  %v1264 = vadd.f32 %v1139, %v926
  %v1265 = vadd.f32 %v1142, %v929
  %v1266 = vadd.f32 %v1145, %v932
  %vm1267 = vcmp.ge.f32.partialorder %v1263, 0.0
  %vm1268 = vcmp.ge.f32.partialorder %v1264, 0.0
  %vm1269 = vcmp.ge.f32.partialorder %v1265, 0.0
  %vm1270 = vcmp.ge.f32.partialorder %v1266, 0.0
  %v1271 = vmul.f32 %v1263, 0.2
  %v1272 = vmul.f32 %v1264, 0.2
  %v1273 = vmul.f32 %v1265, 0.2
  %v1274 = vmul.f32 %v1266, 0.2
  %v1275 = vsel %vm1267, %v1263, %v1271
  %v1276 = vsel %vm1268, %v1264, %v1272
  %v1277 = vsel %vm1269, %v1265, %v1273
  %v1278 = vsel %vm1270, %v1266, %v1274
  %v1279 = vmax.f32 %v1259, %v1275
  %v1280 = vmax.f32 %v1260, %v1276
  %v1281 = vmax.f32 %v1261, %v1277
  %v1282 = vmax.f32 %v1262, %v1278
  %v1283 = vadd.f32 %v1148, %v923
  %v1284 = vadd.f32 %v1151, %v926
  %v1285 = vadd.f32 %v1154, %v929
  %v1286 = vadd.f32 %v1157, %v932
  %vm1287 = vcmp.ge.f32.partialorder %v1283, 0.0
  %vm1288 = vcmp.ge.f32.partialorder %v1284, 0.0
  %vm1289 = vcmp.ge.f32.partialorder %v1285, 0.0
  %vm1290 = vcmp.ge.f32.partialorder %v1286, 0.0
  %v1291 = vmul.f32 %v1283, 0.2
  %v1292 = vmul.f32 %v1284, 0.2
  %v1293 = vmul.f32 %v1285, 0.2
  %v1294 = vmul.f32 %v1286, 0.2
  %v1295 = vsel %vm1287, %v1283, %v1291
  %v1296 = vsel %vm1288, %v1284, %v1292
  %v1297 = vsel %vm1289, %v1285, %v1293
  %v1298 = vsel %vm1290, %v1286, %v1294
  %v1299 = vmax.f32 %v1279, %v1295
  %v1300 = vmax.f32 %v1280, %v1296
  %v1301 = vmax.f32 %v1281, %v1297
  %v1302 = vmax.f32 %v1282, %v1298
  %v1303 = vadd.f32 %v1160, %v923
  %v1304 = vadd.f32 %v1163, %v926
  %v1305 = vadd.f32 %v1166, %v929
  %v1306 = vadd.f32 %v1169, %v932
  %vm1307 = vcmp.ge.f32.partialorder %v1303, 0.0
  %vm1308 = vcmp.ge.f32.partialorder %v1304, 0.0
  %vm1309 = vcmp.ge.f32.partialorder %v1305, 0.0
  %vm1310 = vcmp.ge.f32.partialorder %v1306, 0.0
  %v1311 = vmul.f32 %v1303, 0.2
  %v1312 = vmul.f32 %v1304, 0.2
  %v1313 = vmul.f32 %v1305, 0.2
  %v1314 = vmul.f32 %v1306, 0.2
  %v1315 = vsel %vm1307, %v1303, %v1311
  %v1316 = vsel %vm1308, %v1304, %v1312
  %v1317 = vsel %vm1309, %v1305, %v1313
  %v1318 = vsel %vm1310, %v1306, %v1314
  %v1319 = vmax.f32 %v1299, %v1315
  %v1320 = vmax.f32 %v1300, %v1316
  %v1321 = vmax.f32 %v1301, %v1317
  %v1322 = vmax.f32 %v1302, %v1318
  %v1323 = vadd.f32 %v1172, %v923
  %v1324 = vadd.f32 %v1175, %v926
  %v1325 = vadd.f32 %v1178, %v929
  %v1326 = vadd.f32 %v1181, %v932
  %vm1327 = vcmp.ge.f32.partialorder %v1323, 0.0
  %vm1328 = vcmp.ge.f32.partialorder %v1324, 0.0
  %vm1329 = vcmp.ge.f32.partialorder %v1325, 0.0
  %vm1330 = vcmp.ge.f32.partialorder %v1326, 0.0
  %v1331 = vmul.f32 %v1323, 0.2
  %v1332 = vmul.f32 %v1324, 0.2
  %v1333 = vmul.f32 %v1325, 0.2
  %v1334 = vmul.f32 %v1326, 0.2
  %v1335 = vsel %vm1327, %v1323, %v1331
  %v1336 = vsel %vm1328, %v1324, %v1332
  %v1337 = vsel %vm1329, %v1325, %v1333
  %v1338 = vsel %vm1330, %v1326, %v1334
  %v1339 = vmax.f32 %v1319, %v1335
  %v1340 = vmax.f32 %v1320, %v1336
  %v1341 = vmax.f32 %v1321, %v1337
  %v1342 = vmax.f32 %v1322, %v1338
  %v1343 = vadd.f32 %v1184, %v923
  %v1344 = vadd.f32 %v1187, %v926
  %v1345 = vadd.f32 %v1190, %v929
  %v1346 = vadd.f32 %v1193, %v932
  %vm1347 = vcmp.ge.f32.partialorder %v1343, 0.0
  %vm1348 = vcmp.ge.f32.partialorder %v1344, 0.0
  %vm1349 = vcmp.ge.f32.partialorder %v1345, 0.0
  %vm1350 = vcmp.ge.f32.partialorder %v1346, 0.0
  %v1351 = vmul.f32 %v1343, 0.2
  %v1352 = vmul.f32 %v1344, 0.2
  %v1353 = vmul.f32 %v1345, 0.2
  %v1354 = vmul.f32 %v1346, 0.2
  %v1355 = vsel %vm1347, %v1343, %v1351
  %v1356 = vsel %vm1348, %v1344, %v1352
  %v1357 = vsel %vm1349, %v1345, %v1353
  %v1358 = vsel %vm1350, %v1346, %v1354
  %v1359 = vmax.f32 %v1339, %v1355
  %v1360 = vmax.f32 %v1340, %v1356
  %v1361 = vmax.f32 %v1341, %v1357
  %v1362 = vmax.f32 %v1342, %v1358
  %v1363 = vadd.f32 %v1196, %v923
  %v1364 = vadd.f32 %v1199, %v926
  %v1365 = vadd.f32 %v1202, %v929
  %v1366 = vadd.f32 %v1205, %v932
  %vm1367 = vcmp.ge.f32.partialorder %v1363, 0.0
  %vm1368 = vcmp.ge.f32.partialorder %v1364, 0.0
  %vm1369 = vcmp.ge.f32.partialorder %v1365, 0.0
  %vm1370 = vcmp.ge.f32.partialorder %v1366, 0.0
  %v1371 = vmul.f32 %v1363, 0.2
  %v1372 = vmul.f32 %v1364, 0.2
  %v1373 = vmul.f32 %v1365, 0.2
  %v1374 = vmul.f32 %v1366, 0.2
  %v1375 = vsel %vm1367, %v1363, %v1371
  %v1376 = vsel %vm1368, %v1364, %v1372
  %v1377 = vsel %vm1369, %v1365, %v1373
  %v1378 = vsel %vm1370, %v1366, %v1374
  %v1379 = vmax.f32 %v1359, %v1375
  %v1380 = vmax.f32 %v1360, %v1376
  %v1381 = vmax.f32 %v1361, %v1377
  %v1382 = vmax.f32 %v1362, %v1378
  %v1383 = vld [vmem:[%s17] sm:$0xff]
  %v1384 = vld [vmem:[%s17 + $0x8] sm:$0xff]
  %v1385 = vld [vmem:[%s17 + $0x10] sm:$0xff]
  %v1386 = vld [vmem:[%s17 + $0x18] sm:$0xff]
  %v1387 = vld [vmem:[%s18] sm:$0xff]
  %v1388 = vld [vmem:[%s18 + $0x8] sm:$0xff]
  %v1389 = vld [vmem:[%s18 + $0x10] sm:$0xff]
  %v1390 = vld [vmem:[%s18 + $0x18] sm:$0xff]
  %v1392 = vsel %vm117, %v1379, 0
  %v1395 = vsel %vm117, %v1380, 0
  %v1398 = vsel %vm117, %v1381, 0
  %v1401 = vsel %vm117, %v1382, 0
  %1403 = vmatpush.msra.mxu0 0.0
  %1404 = vmatpush.msra.mxu0 0.0
  %1405 = vmatpush.msra.mxu0 0.0
  %1406 = vmatpush.msra.mxu0 0.0
  %1407 = vmatpush.msra.mxu0 0.0
  %1408 = vmatpush.msra.mxu0 0.0
  %1409 = vmatpush.msra.mxu0 0.0
  %1410 = vmatpush.msra.mxu0 0.0
  %1411 = vmatpush.msra.mxu0 0.0
  %1412 = vmatpush.msra.mxu0 0.0
  %1413 = vmatpush.msra.mxu0 0.0
  %1414 = vmatpush.msra.mxu0 0.0
  %1415 = vmatpush.msra.mxu0 %v1390
  %1416 = vmatpush.msra.mxu0 %v1389
  %1417 = vmatpush.msra.mxu0 %v1388
  %1418 = vmatpush.msra.mxu0 %v1387
  %1419 = vmatmul.f32.gmra.mxu0 %v1392
  %v1420 = vpop.f32.mrf.mxu0
  %v1421 = vadd.f32 0.0, %v1420
  %1422 = vmatmul.f32.gmra.mxu0 %v1395
  %v1423 = vpop.f32.mrf.mxu0
  %v1424 = vadd.f32 0.0, %v1423
  %1425 = vmatmul.f32.gmra.mxu0 %v1398
  %v1426 = vpop.f32.mrf.mxu0
  %v1427 = vadd.f32 0.0, %v1426
  %1428 = vmatmul.f32.gmra.mxu0 %v1401
  %v1429 = vpop.f32.mrf.mxu0
  %v1430 = vadd.f32 0.0, %v1429
  %1431 = vdwg.mxu0
  %v1433 = vsel %vm117, %v874, 0
  %v1436 = vsel %vm117, %v877, 0
  %v1439 = vsel %vm117, %v880, 0
  %v1442 = vsel %vm117, %v883, 0
  %1444 = vmatpush.msra.mxu0 0.0
  %1445 = vmatpush.msra.mxu0 0.0
  %1446 = vmatpush.msra.mxu0 0.0
  %1447 = vmatpush.msra.mxu0 0.0
  %1448 = vmatpush.msra.mxu0 0.0
  %1449 = vmatpush.msra.mxu0 0.0
  %1450 = vmatpush.msra.mxu0 0.0
  %1451 = vmatpush.msra.mxu0 0.0
  %1452 = vmatpush.msra.mxu0 0.0
  %1453 = vmatpush.msra.mxu0 0.0
  %1454 = vmatpush.msra.mxu0 0.0
  %1455 = vmatpush.msra.mxu0 0.0
  %1456 = vmatpush.msra.mxu0 %v1386
  %1457 = vmatpush.msra.mxu0 %v1385
  %1458 = vmatpush.msra.mxu0 %v1384
  %1459 = vmatpush.msra.mxu0 %v1383
  %1460 = vmatmul.f32.gmra.mxu0 %v1433
  %v1461 = vpop.f32.mrf.mxu0
  %v1462 = vadd.f32 %v1421, %v1461
  %1463 = vmatmul.f32.gmra.mxu0 %v1436
  %v1464 = vpop.f32.mrf.mxu0
  %v1465 = vadd.f32 %v1424, %v1464
  %1466 = vmatmul.f32.gmra.mxu0 %v1439
  %v1467 = vpop.f32.mrf.mxu0
  %v1468 = vadd.f32 %v1427, %v1467
  %1469 = vmatmul.f32.gmra.mxu0 %v1442
  %v1470 = vpop.f32.mrf.mxu0
  %v1471 = vadd.f32 %v1430, %v1470
  %1472 = vdwg.mxu0
  %v1473 = vld [vmem:[%s19] sm:$0x1]
  %v1475 = vperm.slane %v1473, 0
  %v1477 = vadd.f32 %v1462, %v1475
  %v1478 = vadd.f32 %v1465, %v1475
  %v1479 = vadd.f32 %v1468, %v1475
  %v1480 = vadd.f32 %v1471, %v1475
  %v1481 = vadd.f32 %v89, %v1477
  %v1482 = vadd.f32 %v90, %v1478
  %v1483 = vadd.f32 %v91, %v1479
  %v1484 = vadd.f32 %v92, %v1480
  %v1485 = vld [vmem:[%s24] sm:$0x1]
  %v1486 = vld [vmem:[%s25] sm:$0x1]
  %v1487 = vsel %vm117, %v1481, 0.0
  %1488 = vadd.xlane.f32.xlu0 %v1487
  %v1489 = vpop.xlane.xlu0 %1488
  %v1490 = vsel %vm117, %v1482, 0.0
  %1491 = vadd.xlane.f32.xlu0 %v1490
  %v1492 = vpop.xlane.xlu0 %1491
  %v1493 = vsel %vm117, %v1483, 0.0
  %1494 = vadd.xlane.f32.xlu0 %v1493
  %v1495 = vpop.xlane.xlu0 %1494
  %v1496 = vsel %vm117, %v1484, 0.0
  %1497 = vadd.xlane.f32.xlu0 %v1496
  %v1498 = vpop.xlane.xlu0 %1497
  %v1499 = vrcp.pop 32.0
  %v1500 = vmul.f32 32.0, %v1499
  %v1501 = vsub.f32 1.0, %v1500
  %v1502 = vmul.f32 %v1499, %v1501
  %v1503 = vadd.f32 %v1499, %v1502
  %vm1504 = vweird.f32 %v1499
  %v1505 = vsel %vm1504, %v1499, %v1503
  %v1506 = vmul.f32 %v1489, %v1505
  %v1507 = vmul.f32 %v1492, %v1505
  %v1508 = vmul.f32 %v1495, %v1505
  %v1509 = vmul.f32 %v1498, %v1505
  %v1510 = vsub.f32 %v1481, %v1506
  %v1511 = vsub.f32 %v1482, %v1507
  %v1512 = vsub.f32 %v1483, %v1508
  %v1513 = vsub.f32 %v1484, %v1509
  %v1514 = vmul.f32 %v1510, %v1510
  %v1515 = vmul.f32 %v1511, %v1511
  %v1516 = vmul.f32 %v1512, %v1512
  %v1517 = vmul.f32 %v1513, %v1513
  %v1518 = vsel %vm117, %v1514, 0.0
  %1519 = vadd.xlane.f32.xlu0 %v1518
  %v1520 = vpop.xlane.xlu0 %1519
  %v1521 = vsel %vm117, %v1515, 0.0
  %1522 = vadd.xlane.f32.xlu0 %v1521
  %v1523 = vpop.xlane.xlu0 %1522
  %v1524 = vsel %vm117, %v1516, 0.0
  %1525 = vadd.xlane.f32.xlu0 %v1524
  %v1526 = vpop.xlane.xlu0 %1525
  %v1527 = vsel %vm117, %v1517, 0.0
  %1528 = vadd.xlane.f32.xlu0 %v1527
  %v1529 = vpop.xlane.xlu0 %1528
  %v1530 = vmul.f32 %v1520, %v1505
  %v1531 = vmul.f32 %v1523, %v1505
  %v1532 = vmul.f32 %v1526, %v1505
  %v1533 = vmul.f32 %v1529, %v1505
  %v1534 = vadd.f32 %v1530, 1e-05
  %v1535 = vadd.f32 %v1531, 1e-05
  %v1536 = vadd.f32 %v1532, 1e-05
  %v1537 = vadd.f32 %v1533, 1e-05
  %v1538 = vrsqrt.pop %v1534
  %v1539 = vmul.f32 %v1538, %v1534
  %v1540 = vmul.f32 %v1539, %v1538
  %v1541 = vmul.f32 0.5, %v1540
  %v1542 = vsub.f32 1.5, %v1541
  %v1543 = vmul.f32 %v1538, %v1542
  %vm1544 = vweird.f32 %v1534
  %vm1545 = vweird.f32 %v1538
  %vm1546 = vmor %vm1544, %vm1545
  %v1547 = vsel %vm1546, %v1538, %v1543
  %v1548 = vrsqrt.pop %v1535
  %v1549 = vmul.f32 %v1548, %v1535
  %v1550 = vmul.f32 %v1549, %v1548
  %v1551 = vmul.f32 0.5, %v1550
  %v1552 = vsub.f32 1.5, %v1551
  %v1553 = vmul.f32 %v1548, %v1552
  %vm1554 = vweird.f32 %v1535
  %vm1555 = vweird.f32 %v1548
  %vm1556 = vmor %vm1554, %vm1555
  %v1557 = vsel %vm1556, %v1548, %v1553
  %v1558 = vrsqrt.pop %v1536
  %v1559 = vmul.f32 %v1558, %v1536
  %v1560 = vmul.f32 %v1559, %v1558
  %v1561 = vmul.f32 0.5, %v1560
  %v1562 = vsub.f32 1.5, %v1561
  %v1563 = vmul.f32 %v1558, %v1562
  %vm1564 = vweird.f32 %v1536
  %vm1565 = vweird.f32 %v1558
  %vm1566 = vmor %vm1564, %vm1565
  %v1567 = vsel %vm1566, %v1558, %v1563
  %v1568 = vrsqrt.pop %v1537
  %v1569 = vmul.f32 %v1568, %v1537
  %v1570 = vmul.f32 %v1569, %v1568
  %v1571 = vmul.f32 0.5, %v1570
  %v1572 = vsub.f32 1.5, %v1571
  %v1573 = vmul.f32 %v1568, %v1572
  %vm1574 = vweird.f32 %v1537
  %vm1575 = vweird.f32 %v1568
  %vm1576 = vmor %vm1574, %vm1575
  %v1577 = vsel %vm1576, %v1568, %v1573
  %v1578 = vmul.f32 %v1510, %v1547
  %v1579 = vmul.f32 %v1511, %v1557
  %v1580 = vmul.f32 %v1512, %v1567
  %v1581 = vmul.f32 %v1513, %v1577
  %v1583 = vperm.slane %v1485, 0
  %v1585 = vmul.f32 %v1578, %v1583
  %v1586 = vmul.f32 %v1579, %v1583
  %v1587 = vmul.f32 %v1580, %v1583
  %v1588 = vmul.f32 %v1581, %v1583
  %v1590 = vperm.slane %v1486, 0
  %v1592 = vadd.f32 %v1585, %v1590
  %v1593 = vadd.f32 %v1586, %v1590
  %v1594 = vadd.f32 %v1587, %v1590
  %v1595 = vadd.f32 %v1588, %v1590
  %v1596 = vld [vmem:[%s20] sm:$0xff]
  %v1597 = vld [vmem:[%s20 + $0x8] sm:$0xff]
  %v1598 = vld [vmem:[%s20 + $0x10] sm:$0xff]
  %v1599 = vld [vmem:[%s20 + $0x18] sm:$0xff]
  %v1600 = vld [vmem:[%s21] sm:$0x1]
  %v1602 = vperm.slane %v1600, 0
  %v1605 = vsel %vm117, %v1592, 0
  %v1608 = vsel %vm117, %v1593, 0
  %v1611 = vsel %vm117, %v1594, 0
  %v1614 = vsel %vm117, %v1595, 0
  %1616 = vmatpush.msra.mxu0 0.0
  %1617 = vmatpush.msra.mxu0 0.0
  %1618 = vmatpush.msra.mxu0 0.0
  %1619 = vmatpush.msra.mxu0 0.0
  %1620 = vmatpush.msra.mxu0 0.0
  %1621 = vmatpush.msra.mxu0 0.0
  %1622 = vmatpush.msra.mxu0 0.0
  %1623 = vmatpush.msra.mxu0 0.0
  %1624 = vmatpush.msra.mxu0 0.0
  %1625 = vmatpush.msra.mxu0 0.0
  %1626 = vmatpush.msra.mxu0 0.0
  %1627 = vmatpush.msra.mxu0 0.0
  %1628 = vmatpush.msra.mxu0 %v1599
  %1629 = vmatpush.msra.mxu0 %v1598
  %1630 = vmatpush.msra.mxu0 %v1597
  %1631 = vmatpush.msra.mxu0 %v1596
  %1632 = vmatmul.f32.gmra.mxu0 %v1605
  %v1633 = vpop.f32.mrf.mxu0
  %v1634 = vadd.f32 %v1602, %v1633
  %1635 = vmatmul.f32.gmra.mxu0 %v1608
  %v1636 = vpop.f32.mrf.mxu0
  %v1637 = vadd.f32 %v1602, %v1636
  %1638 = vmatmul.f32.gmra.mxu0 %v1611
  %v1639 = vpop.f32.mrf.mxu0
  %v1640 = vadd.f32 %v1602, %v1639
  %1641 = vmatmul.f32.gmra.mxu0 %v1614
  %v1642 = vpop.f32.mrf.mxu0
  %v1643 = vadd.f32 %v1602, %v1642
  %1644 = vdwg.mxu0
  %v1645 = vmax.f32 %v1634, 0.0
  %v1646 = vmax.f32 %v1637, 0.0
  %v1647 = vmax.f32 %v1640, 0.0
  %v1648 = vmax.f32 %v1643, 0.0
  %v1649 = vld [vmem:[%s22] sm:$0xff]
  %v1650 = vld [vmem:[%s22 + $0x8] sm:$0xff]
  %v1651 = vld [vmem:[%s22 + $0x10] sm:$0xff]
  %v1652 = vld [vmem:[%s22 + $0x18] sm:$0xff]
  %v1653 = vld [vmem:[%s22 + $0x20] sm:$0xff]
  %v1654 = vld [vmem:[%s22 + $0x28] sm:$0xff]
  %v1655 = vld [vmem:[%s22 + $0x30] sm:$0xff]
  %v1656 = vld [vmem:[%s22 + $0x38] sm:$0xff]
  %v1657 = vld [vmem:[%s23] sm:$0x1]
  %v1659 = vperm.slane %v1657, 0
  %vm1661 = vcmask 523264
  %v1663 = vsel %vm1661, %v1645, 0
  %v1666 = vsel %vm1661, %v1646, 0
  %v1669 = vsel %vm1661, %v1647, 0
  %v1672 = vsel %vm1661, %v1648, 0
  %1674 = vmatpush.msra.mxu0 0.0
  %1675 = vmatpush.msra.mxu0 0.0
  %1676 = vmatpush.msra.mxu0 0.0
  %1677 = vmatpush.msra.mxu0 0.0
  %1678 = vmatpush.msra.mxu0 0.0
  %1679 = vmatpush.msra.mxu0 0.0
  %1680 = vmatpush.msra.mxu0 0.0
  %1681 = vmatpush.msra.mxu0 0.0
  %1682 = vmatpush.msra.mxu0 %v1656
  %1683 = vmatpush.msra.mxu0 %v1655
  %1684 = vmatpush.msra.mxu0 %v1654
  %1685 = vmatpush.msra.mxu0 %v1653
  %1686 = vmatpush.msra.mxu0 %v1652
  %1687 = vmatpush.msra.mxu0 %v1651
  %1688 = vmatpush.msra.mxu0 %v1650
  %1689 = vmatpush.msra.mxu0 %v1649
  %1690 = vmatmul.f32.gmra.mxu0 %v1663
  %v1691 = vpop.f32.mrf.mxu0
  %v1692 = vadd.f32 %v1659, %v1691
  %1693 = vmatmul.f32.gmra.mxu0 %v1666
  %v1694 = vpop.f32.mrf.mxu0
  %v1695 = vadd.f32 %v1659, %v1694
  %1696 = vmatmul.f32.gmra.mxu0 %v1669
  %v1697 = vpop.f32.mrf.mxu0
  %v1698 = vadd.f32 %v1659, %v1697
  %1699 = vmatmul.f32.gmra.mxu0 %v1672
  %v1700 = vpop.f32.mrf.mxu0
  %v1701 = vadd.f32 %v1659, %v1700
  %1702 = vdwg.mxu0
  %v1703 = vadd.f32 %v1592, %v1692
  %v1704 = vadd.f32 %v1593, %v1695
  %v1705 = vadd.f32 %v1594, %v1698
  %v1706 = vadd.f32 %v1595, %v1701
  %v1707 = vld [vmem:[%s26] sm:$0x1]
  %v1708 = vld [vmem:[%s27] sm:$0x1]
  %v1709 = vsel %vm117, %v1703, 0.0
  %1710 = vadd.xlane.f32.xlu0 %v1709
  %v1711 = vpop.xlane.xlu0 %1710
  %v1712 = vsel %vm117, %v1704, 0.0
  %1713 = vadd.xlane.f32.xlu0 %v1712
  %v1714 = vpop.xlane.xlu0 %1713
  %v1715 = vsel %vm117, %v1705, 0.0
  %1716 = vadd.xlane.f32.xlu0 %v1715
  %v1717 = vpop.xlane.xlu0 %1716
  %v1718 = vsel %vm117, %v1706, 0.0
  %1719 = vadd.xlane.f32.xlu0 %v1718
  %v1720 = vpop.xlane.xlu0 %1719
  %v1721 = vmul.f32 %v1711, %v1505
  %v1722 = vmul.f32 %v1714, %v1505
  %v1723 = vmul.f32 %v1717, %v1505
  %v1724 = vmul.f32 %v1720, %v1505
  %v1725 = vsub.f32 %v1703, %v1721
  %v1726 = vsub.f32 %v1704, %v1722
  %v1727 = vsub.f32 %v1705, %v1723
  %v1728 = vsub.f32 %v1706, %v1724
  %v1729 = vmul.f32 %v1725, %v1725
  %v1730 = vmul.f32 %v1726, %v1726
  %v1731 = vmul.f32 %v1727, %v1727
  %v1732 = vmul.f32 %v1728, %v1728
  %v1733 = vsel %vm117, %v1729, 0.0
  %1734 = vadd.xlane.f32.xlu0 %v1733
  %v1735 = vpop.xlane.xlu0 %1734
  %v1736 = vsel %vm117, %v1730, 0.0
  %1737 = vadd.xlane.f32.xlu0 %v1736
  %v1738 = vpop.xlane.xlu0 %1737
  %v1739 = vsel %vm117, %v1731, 0.0
  %1740 = vadd.xlane.f32.xlu0 %v1739
  %v1741 = vpop.xlane.xlu0 %1740
  %v1742 = vsel %vm117, %v1732, 0.0
  %1743 = vadd.xlane.f32.xlu0 %v1742
  %v1744 = vpop.xlane.xlu0 %1743
  %v1745 = vmul.f32 %v1735, %v1505
  %v1746 = vmul.f32 %v1738, %v1505
  %v1747 = vmul.f32 %v1741, %v1505
  %v1748 = vmul.f32 %v1744, %v1505
  %v1749 = vadd.f32 %v1745, 1e-05
  %v1750 = vadd.f32 %v1746, 1e-05
  %v1751 = vadd.f32 %v1747, 1e-05
  %v1752 = vadd.f32 %v1748, 1e-05
  %v1753 = vrsqrt.pop %v1749
  %v1754 = vmul.f32 %v1753, %v1749
  %v1755 = vmul.f32 %v1754, %v1753
  %v1756 = vmul.f32 0.5, %v1755
  %v1757 = vsub.f32 1.5, %v1756
  %v1758 = vmul.f32 %v1753, %v1757
  %vm1759 = vweird.f32 %v1749
  %vm1760 = vweird.f32 %v1753
  %vm1761 = vmor %vm1759, %vm1760
  %v1762 = vsel %vm1761, %v1753, %v1758
  %v1763 = vrsqrt.pop %v1750
  %v1764 = vmul.f32 %v1763, %v1750
  %v1765 = vmul.f32 %v1764, %v1763
  %v1766 = vmul.f32 0.5, %v1765
  %v1767 = vsub.f32 1.5, %v1766
  %v1768 = vmul.f32 %v1763, %v1767
  %vm1769 = vweird.f32 %v1750
  %vm1770 = vweird.f32 %v1763
  %vm1771 = vmor %vm1769, %vm1770
  %v1772 = vsel %vm1771, %v1763, %v1768
  %v1773 = vrsqrt.pop %v1751
  %v1774 = vmul.f32 %v1773, %v1751
  %v1775 = vmul.f32 %v1774, %v1773
  %v1776 = vmul.f32 0.5, %v1775
  %v1777 = vsub.f32 1.5, %v1776
  %v1778 = vmul.f32 %v1773, %v1777
  %vm1779 = vweird.f32 %v1751
  %vm1780 = vweird.f32 %v1773
  %vm1781 = vmor %vm1779, %vm1780
  %v1782 = vsel %vm1781, %v1773, %v1778
  %v1783 = vrsqrt.pop %v1752
  %v1784 = vmul.f32 %v1783, %v1752
  %v1785 = vmul.f32 %v1784, %v1783
  %v1786 = vmul.f32 0.5, %v1785
  %v1787 = vsub.f32 1.5, %v1786
  %v1788 = vmul.f32 %v1783, %v1787
  %vm1789 = vweird.f32 %v1752
  %vm1790 = vweird.f32 %v1783
  %vm1791 = vmor %vm1789, %vm1790
  %v1792 = vsel %vm1791, %v1783, %v1788
  %v1793 = vmul.f32 %v1725, %v1762
  %v1794 = vmul.f32 %v1726, %v1772
  %v1795 = vmul.f32 %v1727, %v1782
  %v1796 = vmul.f32 %v1728, %v1792
  %v1798 = vperm.slane %v1707, 0
  %v1800 = vmul.f32 %v1793, %v1798
  %v1801 = vmul.f32 %v1794, %v1798
  %v1802 = vmul.f32 %v1795, %v1798
  %v1803 = vmul.f32 %v1796, %v1798
  %v1805 = vperm.slane %v1708, 0
  %v1807 = vadd.f32 %v1800, %v1805
  %v1808 = vadd.f32 %v1801, %v1805
  %v1809 = vadd.f32 %v1802, %v1805
  %v1810 = vadd.f32 %v1803, %v1805
  %1811 = vst.msk [vmem:[%s28] sm:$0xff] %vm117, %v1807
  %1812 = vst.msk [vmem:[%s28 + $0x8] sm:$0xff] %vm117, %v1808
  %1813 = vst.msk [vmem:[%s28 + $0x10] sm:$0xff] %vm117, %v1809
  %1814 = vst.msk [vmem:[%s28 + $0x18] sm:$0xff] %vm117, %v1810
  // Predicated region
  $region114: #{encoder_layer_forward.1} parent=0 // pred_check
    _
  $region115: #{encoder_layer_forward.1} parent=0 // pred_check_branch
    %1816 = sbr.rel (0) target = $region117
  $region116: #{encoder_layer_forward.1} parent=0 // pred_region
    _
  $region117: #{encoder_layer_forward.1} parent=0 // pred_fallthru
    _
  // Predicated region
  $region118: #{encoder_layer_forward.1} parent=0 // pred_check
    _
  $region119: #{encoder_layer_forward.1} parent=0 // pred_check_branch
    %1818 = sbr.rel (0) target = $region121
  $region120: #{encoder_layer_forward.1} parent=0 // pred_region
    _
  $region121: #{encoder_layer_forward.1} parent=0 // pred_fallthru
    _

</llo_original>
